<compile_context>
chip_gen: v7x
topology: tpu7x:2x2x1
jax: 0.10.0
libtpu: 0.0.40
codegen_flags: <defaults>
</compile_context>

<pallas_src>
import math
import functools

import jax
import jax.numpy as jnp
from jax import lax
from jax.experimental import pallas as pl
from jax.experimental.pallas import tpu as pltpu


_SQRT_2_OVER_PI = math.sqrt(2.0 / math.pi)


def _new_gelu(x):
    # NewGELU, computed in f32 (no bf16 VPU/EUP on v5e).
    return 0.5 * x * (1.0 + jnp.tanh(_SQRT_2_OVER_PI * (x + 0.044715 * x * x * x)))


# ----------------------------- tiling helpers --------------------------------

def _pick_tile(dim, target, align):
    """Largest tile <= target that evenly divides `dim` and is a multiple of
    `align`.  Falls back to the full dim (always a legal BlockSpec block)."""
    if dim <= target:
        return dim
    t = (min(target, dim) // align) * align
    while t >= align:
        if dim % t == 0:
            return t
        t -= align
    return dim


def _vmem_limit(*nbytes):
    """Scoped-VMEM request sized from the per-step tile footprint
    (double-buffered) with ~50% headroom, capped at v7x physical (64 MiB)."""
    total = 2 * sum(int(n) for n in nbytes)
    total = int(total * 1.5)
    return max(32 << 20, min(total, 64 << 20))


# ------------------------------- kernels --------------------------------------

def _linear_kernel(*refs, activation, has_residual):
    # y = x @ W + b   (optionally NewGELU, optionally + residual)
    # grid = (M tiles, N tiles, K tiles); K is the reduction ("arbitrary") axis.
    if has_residual:
        x_ref, w_ref, b_ref, r_ref, o_ref, acc_ref = refs
    else:
        x_ref, w_ref, b_ref, o_ref, acc_ref = refs
        r_ref = None
    k = pl.program_id(2)

    @pl.when(k == 0)
    def _():
        acc_ref[...] = jnp.zeros_like(acc_ref)

    # bf16 MXU inputs, f32 accumulation.
    acc_ref[...] += jnp.dot(x_ref[...].astype(w_ref.dtype), w_ref[...],
                            preferred_element_type=jnp.float32)

    @pl.when(k == pl.num_programs(2) - 1)
    def _():
        y = acc_ref[...] + b_ref[...]
        if activation == "gelu":
            y = _new_gelu(y)
        if r_ref is not None:
            y = y + r_ref[...]
        o_ref[...] = y.astype(o_ref.dtype)


def _mlp_kernel(x_ref, w1_ref, b1_ref, w2_ref, b2_ref, o_ref, acc_ref):
    # Fused MLP block: o = x + gelu(x @ W1 + b1) @ W2 + b2
    # grid = (M tiles, hidden (4C) tiles); hidden axis is "arbitrary".
    j = pl.program_id(1)

    @pl.when(j == 0)
    def _():
        acc_ref[...] = jnp.zeros_like(acc_ref)

    h = jnp.dot(x_ref[...].astype(w1_ref.dtype), w1_ref[...],
                preferred_element_type=jnp.float32)
    h = _new_gelu(h + b1_ref[...])                    # f32 epilogue
    acc_ref[...] += jnp.dot(h.astype(w2_ref.dtype), w2_ref[...],
                            preferred_element_type=jnp.float32)

    @pl.when(j == pl.num_programs(1) - 1)
    def _():
        o_ref[...] = (acc_ref[...] + b2_ref[...] + x_ref[...]).astype(o_ref.dtype)


def _flash_attn_kernel(q_ref, k_ref, v_ref, o_ref, m_ref, l_ref, acc_ref,
                       *, scale, tq, tkv):
    # Flash-style causal attention, a block of heads per grid step.
    # grid = (head blocks, q tiles, kv tiles); kv is the "arbitrary" axis.
    qi = pl.program_id(1)
    ki = pl.program_id(2)

    @pl.when(ki == 0)
    def _():
        m_ref[...] = jnp.full(m_ref.shape, -jnp.inf, m_ref.dtype)
        l_ref[...] = jnp.zeros_like(l_ref)
        acc_ref[...] = jnp.zeros_like(acc_ref)

    q_start = qi * tq
    k_start = ki * tkv

    # Skip kv blocks that lie entirely above the causal diagonal.
    @pl.when(k_start <= q_start + (tq - 1))
    def _():
        q = q_ref[...].astype(jnp.bfloat16)
        k = k_ref[...].astype(jnp.bfloat16)
        s = jnp.einsum("hqd,hkd->hqk", q, k,
                       preferred_element_type=jnp.float32) * scale
        rows = q_start + lax.broadcasted_iota(jnp.int32, s.shape, 1)
        cols = k_start + lax.broadcasted_iota(jnp.int32, s.shape, 2)
        s = jnp.where(cols > rows, -jnp.inf, s)       # causal mask (triu, diag=1)

        m_prev = m_ref[...]
        m_new = jnp.maximum(m_prev, jnp.max(s, axis=-1, keepdims=True))
        alpha = jnp.exp(m_prev - m_new)
        p = jnp.exp(s - m_new)
        l_ref[...] = alpha * l_ref[...] + jnp.sum(p, axis=-1, keepdims=True)
        acc_ref[...] = alpha * acc_ref[...] + jnp.einsum(
            "hqk,hkd->hqd", p.astype(jnp.bfloat16), v_ref[...].astype(jnp.bfloat16),
            preferred_element_type=jnp.float32)
        m_ref[...] = m_new

    @pl.when(ki == pl.num_programs(2) - 1)
    def _():
        inv_l = pl.reciprocal(l_ref[...], approx=True)
        o_ref[...] = (acc_ref[...] * inv_l).astype(o_ref.dtype)


# --------------------------- pallas wrappers ----------------------------------

def linear(x2d, w, b, activation=None, residual=None):
    M, K = x2d.shape
    K2, N = w.shape
    assert K == K2
    tm = _pick_tile(M, 256, 8)
    tn = _pick_tile(N, 256, 128)
    tk = _pick_tile(K, 512, 128)
    grid = (M // tm, N // tn, K // tk)
    b2d = b.reshape(1, N)

    in_specs = [
        pl.BlockSpec((tm, tk), lambda i, j, k: (i, k)),
        pl.BlockSpec((tk, tn), lambda i, j, k: (k, j)),
        pl.BlockSpec((1, tn), lambda i, j, k: (0, j)),
    ]
    args = [x2d, w, b2d]
    if residual is not None:
        in_specs.append(pl.BlockSpec((tm, tn), lambda i, j, k: (i, j)))
        args.append(residual)

    bytes_accessed = (x2d.size * x2d.dtype.itemsize + w.size * w.dtype.itemsize
                      + b2d.size * 4 + M * N * 4
                      + (M * N * 4 if residual is not None else 0))

    kernel = functools.partial(_linear_kernel, activation=activation,
                               has_residual=residual is not None)
    return pl.pallas_call(
        kernel,
        out_shape=jax.ShapeDtypeStruct((M, N), jnp.float32),
        grid=grid,
        in_specs=in_specs,
        out_specs=pl.BlockSpec((tm, tn), lambda i, j, k: (i, j)),
        scratch_shapes=[pltpu.VMEM((tm, tn), jnp.float32)],
        compiler_params=pltpu.CompilerParams(
            dimension_semantics=("parallel", "parallel", "arbitrary"),
            vmem_limit_bytes=_vmem_limit(tm * tk * 4, tk * tn * 2, tn * 4,
                                         3 * tm * tn * 4)),
        cost_estimate=pl.CostEstimate(
            flops=2 * M * N * K,
            transcendentals=M * N if activation == "gelu" else 0,
            bytes_accessed=int(bytes_accessed)),
    )(*args)


def mlp_block(x2d, w1, b1, w2, b2):
    """Fused x + c_proj(NewGELU(c_fc(x))) — the 4C hidden never hits HBM."""
    M, C = x2d.shape
    H = w1.shape[1]
    tm = _pick_tile(M, 128, 8)
    th = _pick_tile(H, 512, 128)
    grid = (M // tm, H // th)
    return pl.pallas_call(
        _mlp_kernel,
        out_shape=jax.ShapeDtypeStruct((M, C), jnp.float32),
        grid=grid,
        in_specs=[pl.BlockSpec((tm, C), lambda i, j: (i, 0)),
                  pl.BlockSpec((C, th), lambda i, j: (0, j)),
                  pl.BlockSpec((1, th), lambda i, j: (0, j)),
                  pl.BlockSpec((th, C), lambda i, j: (j, 0)),
                  pl.BlockSpec((1, C), lambda i, j: (0, 0))],
        out_specs=pl.BlockSpec((tm, C), lambda i, j: (i, 0)),
        scratch_shapes=[pltpu.VMEM((tm, C), jnp.float32)],
        compiler_params=pltpu.CompilerParams(
            dimension_semantics=("parallel", "arbitrary"),
            vmem_limit_bytes=_vmem_limit(2 * tm * C * 4, C * th * 2, th * 4,
                                         th * C * 2, C * 4, tm * C * 4)),
        cost_estimate=pl.CostEstimate(
            flops=4 * M * H * C,
            transcendentals=M * H,
            bytes_accessed=int(4 * 2 * M * C + 2 * 2 * C * H)),
    )(x2d, w1, b1.reshape(1, H), w2, b2.reshape(1, C))


def causal_attention(q, k, v, scale):
    """q,k,v: (B*n_head, T, hs) -> (B*n_head, T, hs), causal softmax(QK^T)V."""
    BH, T, hs = q.shape
    hb = _pick_tile(BH, max(1, 128 // max(hs, 1)), 1)   # batch heads -> lane density
    tq = _pick_tile(T, 256, 8)
    tkv = _pick_tile(T, 256, 8)
    grid = (BH // hb, T // tq, T // tkv)

    q_spec = pl.BlockSpec((hb, tq, hs), lambda h, i, j: (h, i, 0))
    kv_spec = pl.BlockSpec((hb, tkv, hs), lambda h, i, j: (h, j, 0))

    kernel = functools.partial(_flash_attn_kernel, scale=scale, tq=tq, tkv=tkv)
    return pl.pallas_call(
        kernel,
        out_shape=jax.ShapeDtypeStruct((BH, T, hs), jnp.float32),
        grid=grid,
        in_specs=[q_spec, kv_spec, kv_spec],
        out_specs=q_spec,
        scratch_shapes=[pltpu.VMEM((hb, tq, 1), jnp.float32),
                        pltpu.VMEM((hb, tq, 1), jnp.float32),
                        pltpu.VMEM((hb, tq, hs), jnp.float32)],
        compiler_params=pltpu.CompilerParams(
            dimension_semantics=("parallel", "parallel", "arbitrary"),
            vmem_limit_bytes=_vmem_limit(hb * tq * hs * 4, 2 * hb * tkv * hs * 4,
                                         2 * hb * tq * hs * 4)),
        cost_estimate=pl.CostEstimate(
            flops=4 * BH * T * T * hs,
            transcendentals=BH * T * T,
            bytes_accessed=int(4 * 4 * BH * T * hs)),
    )(q, k, v)


# ------------------------------ model -----------------------------------------

def init_linear(key, in_dim, out_dim):
    # PyTorch nn.Linear default init U(-1/sqrt(in), 1/sqrt(in)); weight stored
    # [in, out] (pre-transposed) and cast to bf16 for the MXU; bias stays f32.
    kw, kb = jax.random.split(key)
    bound = 1.0 / math.sqrt(in_dim)
    w = jax.random.uniform(kw, (in_dim, out_dim), jnp.float32, -bound, bound)
    b = jax.random.uniform(kb, (out_dim,), jnp.float32, -bound, bound)
    return w.astype(jnp.bfloat16), b


def init_params(key, *, in_dim, n_embd, n_head, n_layer, out_dim, max_seq_length):
    keys = jax.random.split(key, 3 + 4 * n_layer)
    params = {
        "l_in": init_linear(keys[0], in_dim, n_embd),
        "l_out": init_linear(keys[1], n_embd, out_dim),
        # module inits pos-embeddings to zeros; use small random values so the
        # add path is actually exercised (synthetic weights).
        "pos": 0.02 * jax.random.normal(keys[2], (max_seq_length, n_embd), jnp.float32),
        "blocks": [],
    }
    for i in range(n_layer):
        k0, k1, k2, k3 = keys[3 + 4 * i: 3 + 4 * (i + 1)]
        params["blocks"].append({
            "c_attn": init_linear(k0, n_embd, 3 * n_embd),
            "c_proj": init_linear(k1, n_embd, n_embd),
            "c_fc":   init_linear(k2, n_embd, 4 * n_embd),
            "m_proj": init_linear(k3, 4 * n_embd, n_embd),
        })
    return params
    # TODO(synk): layernorm=True path (ln1/ln2/ln_f) not implemented; default
    # forward(..., layernorm=False) never uses it.
    # TODO(synk): `insert`/`insertall` activation patching hooks not implemented.


def transformer_forward(params, x, *, n_embd, n_head):
    B, T, in_dim = x.shape
    C = n_embd
    hs = C // n_head
    scale = 1.0 / math.sqrt(hs)

    # input projection + positional embeddings
    h = linear(x.reshape(B * T, in_dim), *params["l_in"]).reshape(B, T, C)
    h = h + params["pos"][:T][None, :, :]
    h2d = h.reshape(B * T, C)

    for blk in params["blocks"]:
        # ---- causal self-attention ----
        x_proj = linear(h2d, *blk["c_attn"]).reshape(B, T, 3 * C)
        # exact replication of the reference's direct reshape (no transpose)
        q = x_proj[:, :, :C].reshape(B * n_head, T, hs)
        k = x_proj[:, :, C:2 * C].reshape(B * n_head, T, hs)
        v = x_proj[:, :, 2 * C:].reshape(B * n_head, T, hs)
        y = causal_attention(q, k, v, scale)                      # (B*nh, T, hs)
        # TODO(synk): head-merge transpose kept at XLA level (fusing it into the
        # attention output BlockSpec needs an in-kernel relayout).
        y = y.reshape(B, n_head, T, hs).transpose(0, 2, 1, 3).reshape(B * T, C)
        h2d = linear(y, *blk["c_proj"], residual=h2d)             # x = x + attn

        # ---- fused MLP (c_fc + NewGELU + c_proj + residual) ----
        h2d = mlp_block(h2d, *blk["c_fc"], *blk["m_proj"])        # x = x + mlp

    out_dim = params["l_out"][0].shape[1]
    return linear(h2d, *params["l_out"]).reshape(B, T, out_dim)


# pure-JAX reference (same math: bf16 MXU operands, f32 accumulation, plain
# softmax) for a correctness check
def reference_forward(params, x, *, n_embd, n_head):
    B, T, in_dim = x.shape
    C = n_embd
    hs = C // n_head
    scale = 1.0 / math.sqrt(hs)

    def lin(x2d, wb):
        w, b = wb
        return jnp.dot(x2d.astype(w.dtype), w,
                       preferred_element_type=jnp.float32) + b

    h = lin(x.reshape(B * T, in_dim), params["l_in"]).reshape(B, T, C)
    h = h + params["pos"][:T][None, :, :]
    for blk in params["blocks"]:
        h2d = h.reshape(B * T, C)
        x_proj = lin(h2d, blk["c_attn"]).reshape(B, T, 3 * C)
        q = x_proj[:, :, :C].reshape(B, n_head, T, hs)
        k = x_proj[:, :, C:2 * C].reshape(B, n_head, T, hs)
        v = x_proj[:, :, 2 * C:].reshape(B, n_head, T, hs)
        att = jnp.einsum("bhqd,bhkd->bhqk", q.astype(jnp.bfloat16),
                         k.astype(jnp.bfloat16),
                         preferred_element_type=jnp.float32) * scale
        mask = jnp.triu(jnp.full((T, T), -jnp.inf), k=1)
        att = att + mask[None, None]
        att = jax.nn.softmax(att, axis=-1)
        y = jnp.einsum("bhqk,bhkd->bhqd", att.astype(jnp.bfloat16),
                       v.astype(jnp.bfloat16),
                       preferred_element_type=jnp.float32)
        y = y.transpose(0, 2, 1, 3).reshape(B * T, C)
        h2d = h2d + lin(y, blk["c_proj"])
        f = _new_gelu(lin(h2d, blk["c_fc"]))
        h2d = h2d + lin(f, blk["m_proj"])
        h = h2d.reshape(B, T, C)
    return lin(h.reshape(B * T, C), params["l_out"]).reshape(B, T, -1)


# ------------------------------- main ------------------------------------------

if __name__ == "__main__":
    # small config consistent with the module
    in_dim, n_embd, n_head, n_layer, out_dim, max_seq_length = 8, 32, 4, 2, 8, 16
    B, T = 2, 8

    key = jax.random.PRNGKey(0)
    kp, kx = jax.random.split(key)
    params = init_params(kp, in_dim=in_dim, n_embd=n_embd, n_head=n_head,
                         n_layer=n_layer, out_dim=out_dim,
                         max_seq_length=max_seq_length)
    x = jax.random.normal(kx, (B, T, in_dim), jnp.float32)

    fwd = jax.jit(functools.partial(transformer_forward,
                                    n_embd=n_embd, n_head=n_head))
    y = jax.block_until_ready(fwd(params, x))

    y_ref = reference_forward(params, x, n_embd=n_embd, n_head=n_head)
    assert y.shape == (B, T, out_dim)
    assert bool(jnp.all(jnp.isfinite(y))), "non-finite output"
    assert jnp.allclose(y, y_ref, atol=2e-2, rtol=2e-2), "mismatch vs JAX reference"

    print("KERNEL_OK")
</pallas_src>

<mosaic_0001>
module attributes {stable_mosaic.version = 11 : i64} {
  func.func @_linear_kernel(%arg0: i32, %arg1: i32, %arg2: i32, %arg3: memref<16x32xf32, #tpu.memory_space<vmem>>, %arg4: memref<32x96xbf16, #tpu.memory_space<vmem>>, %arg5: memref<1x96xf32, #tpu.memory_space<vmem>>, %arg6: memref<16x96xf32, #tpu.memory_space<vmem>>, %arg7: memref<16x96xf32, #tpu.memory_space<vmem>>) attributes {dimension_semantics = [#tpu.dimension_semantics<parallel>, #tpu.dimension_semantics<parallel>, #tpu.dimension_semantics<arbitrary>], iteration_bounds = array<i64: 1, 1, 1>, scalar_prefetch = 0 : i64, scratch_operands = 1 : i64, tpu.core_type = #tpu.core_type<tc>, window_params = [{transform_indices = @transform_0, window_bounds = array<i64: 16, 32>}, {transform_indices = @transform_1, window_bounds = array<i64: 32, 96>}, {transform_indices = @transform_2, window_bounds = array<i64: 1, 96>}, {transform_indices = @transform_3, window_bounds = array<i64: 16, 96>}]} {
    %c0_i32 = arith.constant 0 : i32
    %0 = arith.cmpi eq, %arg2, %c0_i32 : i32
    %1 = arith.extui %0 : i1 to i32
    %c0_i32_0 = arith.constant 0 : i32
    %2 = arith.cmpi ne, %1, %c0_i32_0 : i32
    scf.if %2 {
      %cst_10 = arith.constant 0.000000e+00 : f32
      %13 = vector.broadcast %cst_10 : f32 to vector<16x96xf32>
      %c0_11 = arith.constant 0 : index
      %c0_12 = arith.constant 0 : index
      %14 = vector.load %arg7[%c0_11, %c0_12] : memref<16x96xf32, #tpu.memory_space<vmem>>, vector<16x96xf32>
      tpu.vector_store %arg7[%c0_11, %c0_12], %13 {strides = array<i32>} : memref<16x96xf32, #tpu.memory_space<vmem>>, vector<16x96xf32>,
    } else {
    }
    %c0 = arith.constant 0 : index
    %c0_1 = arith.constant 0 : index
    %3 = vector.load %arg7[%c0, %c0_1] : memref<16x96xf32, #tpu.memory_space<vmem>>, vector<16x96xf32>
    %c0_2 = arith.constant 0 : index
    %c0_3 = arith.constant 0 : index
    %4 = vector.load %arg3[%c0_2, %c0_3] : memref<16x32xf32, #tpu.memory_space<vmem>>, vector<16x32xf32>
    %5 = arith.truncf %4 : vector<16x32xf32> to vector<16x32xbf16>
    %c0_4 = arith.constant 0 : index
    %c0_5 = arith.constant 0 : index
    %6 = vector.load %arg4[%c0_4, %c0_5] : memref<32x96xbf16, #tpu.memory_space<vmem>>, vector<32x96xbf16>
    %cst = arith.constant dense<0.000000e+00> : vector<16x96xf32>
    %7 = tpu.matmul %5, %6, %cst {dimension_numbers = #tpu.dot_dimension_numbers<[1], [0], [0], [1], [0, 0, 1, 1], [], []>} : vector<16x32xbf16>, vector<32x96xbf16>, vector<16x96xf32> -> vector<16x96xf32>
    %8 = arith.addf %3, %7 : vector<16x96xf32>
    %c0_6 = arith.constant 0 : index
    %c0_7 = arith.constant 0 : index
    %9 = vector.load %arg7[%c0_6, %c0_7] : memref<16x96xf32, #tpu.memory_space<vmem>>, vector<16x96xf32>
    tpu.vector_store %arg7[%c0_6, %c0_7], %8 {strides = array<i32>} : memref<16x96xf32, #tpu.memory_space<vmem>>, vector<16x96xf32>,
    %c0_i32_8 = arith.constant 0 : i32
    %10 = arith.cmpi eq, %arg2, %c0_i32_8 : i32
    %11 = arith.extui %10 : i1 to i32
    %c0_i32_9 = arith.constant 0 : i32
    %12 = arith.cmpi ne, %11, %c0_i32_9 : i32
    scf.if %12 {
      %c0_10 = arith.constant 0 : index
      %c0_11 = arith.constant 0 : index
      %13 = vector.load %arg7[%c0_10, %c0_11] : memref<16x96xf32, #tpu.memory_space<vmem>>, vector<16x96xf32>
      %c0_12 = arith.constant 0 : index
      %c0_13 = arith.constant 0 : index
      %14 = vector.load %arg5[%c0_12, %c0_13] : memref<1x96xf32, #tpu.memory_space<vmem>>, vector<1x96xf32>
      %15 = vector.broadcast %14 : vector<1x96xf32> to vector<16x96xf32>
      %16 = arith.addf %13, %15 : vector<16x96xf32>
      %c0_14 = arith.constant 0 : index
      %c0_15 = arith.constant 0 : index
      %17 = vector.load %arg6[%c0_14, %c0_15] : memref<16x96xf32, #tpu.memory_space<vmem>>, vector<16x96xf32>
      tpu.vector_store %arg6[%c0_14, %c0_15], %16 {strides = array<i32>} : memref<16x96xf32, #tpu.memory_space<vmem>>, vector<16x96xf32>,
    } else {
    }
    return
  }
  func.func @transform_0(%arg0: i32, %arg1: i32, %arg2: i32) -> (i32, i32) {
    %c0_i32 = arith.constant 0 : i32
    return %arg0, %arg2 : i32, i32
  }
  func.func @transform_1(%arg0: i32, %arg1: i32, %arg2: i32) -> (i32, i32) {
    %c0_i32 = arith.constant 0 : i32
    return %arg2, %arg1 : i32, i32
  }
  func.func @transform_2(%arg0: i32, %arg1: i32, %arg2: i32) -> (i32, i32) {
    %c0_i32 = arith.constant 0 : i32
    %c0_i32_0 = arith.constant 0 : i32
    return %c0_i32, %arg1 : i32, i32
  }
  func.func @transform_3(%arg0: i32, %arg1: i32, %arg2: i32) -> (i32, i32) {
    %c0_i32 = arith.constant 0 : i32
    return %arg0, %arg1 : i32, i32
  }
}

module attributes {stable_mosaic.version = 11 : i64} {
  func.func @_linear_kernel(%arg0: i32, %arg1: i32, %arg2: i32, %arg3: memref<16x8xf32, #tpu.memory_space<vmem>>, %arg4: memref<8x32xbf16, #tpu.memory_space<vmem>>, %arg5: memref<1x32xf32, #tpu.memory_space<vmem>>, %arg6: memref<16x32xf32, #tpu.memory_space<vmem>>, %arg7: memref<16x32xf32, #tpu.memory_space<vmem>>) attributes {dimension_semantics = [#tpu.dimension_semantics<parallel>, #tpu.dimension_semantics<parallel>, #tpu.dimension_semantics<arbitrary>], iteration_bounds = array<i64: 1, 1, 1>, scalar_prefetch = 0 : i64, scratch_operands = 1 : i64, tpu.core_type = #tpu.core_type<tc>, window_params = [{transform_indices = @transform_0, window_bounds = array<i64: 16, 8>}, {transform_indices = @transform_1, window_bounds = array<i64: 8, 32>}, {transform_indices = @transform_2, window_bounds = array<i64: 1, 32>}, {transform_indices = @transform_3, window_bounds = array<i64: 16, 32>}]} {
    %c0_i32 = arith.constant 0 : i32
    %0 = arith.cmpi eq, %arg2, %c0_i32 : i32
    %1 = arith.extui %0 : i1 to i32
    %c0_i32_0 = arith.constant 0 : i32
    %2 = arith.cmpi ne, %1, %c0_i32_0 : i32
    scf.if %2 {
      %cst_10 = arith.constant 0.000000e+00 : f32
      %13 = vector.broadcast %cst_10 : f32 to vector<16x32xf32>
      %c0_11 = arith.constant 0 : index
      %c0_12 = arith.constant 0 : index
      %14 = vector.load %arg7[%c0_11, %c0_12] : memref<16x32xf32, #tpu.memory_space<vmem>>, vector<16x32xf32>
      tpu.vector_store %arg7[%c0_11, %c0_12], %13 {strides = array<i32>} : memref<16x32xf32, #tpu.memory_space<vmem>>, vector<16x32xf32>,
    } else {
    }
    %c0 = arith.constant 0 : index
    %c0_1 = arith.constant 0 : index
    %3 = vector.load %arg7[%c0, %c0_1] : memref<16x32xf32, #tpu.memory_space<vmem>>, vector<16x32xf32>
    %c0_2 = arith.constant 0 : index
    %c0_3 = arith.constant 0 : index
    %4 = vector.load %arg3[%c0_2, %c0_3] : memref<16x8xf32, #tpu.memory_space<vmem>>, vector<16x8xf32>
    %5 = arith.truncf %4 : vector<16x8xf32> to vector<16x8xbf16>
    %c0_4 = arith.constant 0 : index
    %c0_5 = arith.constant 0 : index
    %6 = vector.load %arg4[%c0_4, %c0_5] : memref<8x32xbf16, #tpu.memory_space<vmem>>, vector<8x32xbf16>
    %cst = arith.constant dense<0.000000e+00> : vector<16x32xf32>
    %7 = tpu.matmul %5, %6, %cst {dimension_numbers = #tpu.dot_dimension_numbers<[1], [0], [0], [1], [0, 0, 1, 1], [], []>} : vector<16x8xbf16>, vector<8x32xbf16>, vector<16x32xf32> -> vector<16x32xf32>
    %8 = arith.addf %3, %7 : vector<16x32xf32>
    %c0_6 = arith.constant 0 : index
    %c0_7 = arith.constant 0 : index
    %9 = vector.load %arg7[%c0_6, %c0_7] : memref<16x32xf32, #tpu.memory_space<vmem>>, vector<16x32xf32>
    tpu.vector_store %arg7[%c0_6, %c0_7], %8 {strides = array<i32>} : memref<16x32xf32, #tpu.memory_space<vmem>>, vector<16x32xf32>,
    %c0_i32_8 = arith.constant 0 : i32
    %10 = arith.cmpi eq, %arg2, %c0_i32_8 : i32
    %11 = arith.extui %10 : i1 to i32
    %c0_i32_9 = arith.constant 0 : i32
    %12 = arith.cmpi ne, %11, %c0_i32_9 : i32
    scf.if %12 {
      %c0_10 = arith.constant 0 : index
      %c0_11 = arith.constant 0 : index
      %13 = vector.load %arg7[%c0_10, %c0_11] : memref<16x32xf32, #tpu.memory_space<vmem>>, vector<16x32xf32>
      %c0_12 = arith.constant 0 : index
      %c0_13 = arith.constant 0 : index
      %14 = vector.load %arg5[%c0_12, %c0_13] : memref<1x32xf32, #tpu.memory_space<vmem>>, vector<1x32xf32>
      %15 = vector.broadcast %14 : vector<1x32xf32> to vector<16x32xf32>
      %16 = arith.addf %13, %15 : vector<16x32xf32>
      %c0_14 = arith.constant 0 : index
      %c0_15 = arith.constant 0 : index
      %17 = vector.load %arg6[%c0_14, %c0_15] : memref<16x32xf32, #tpu.memory_space<vmem>>, vector<16x32xf32>
      tpu.vector_store %arg6[%c0_14, %c0_15], %16 {strides = array<i32>} : memref<16x32xf32, #tpu.memory_space<vmem>>, vector<16x32xf32>,
    } else {
    }
    return
  }
  func.func @transform_0(%arg0: i32, %arg1: i32, %arg2: i32) -> (i32, i32) {
    %c0_i32 = arith.constant 0 : i32
    return %arg0, %arg2 : i32, i32
  }
  func.func @transform_1(%arg0: i32, %arg1: i32, %arg2: i32) -> (i32, i32) {
    %c0_i32 = arith.constant 0 : i32
    return %arg2, %arg1 : i32, i32
  }
  func.func @transform_2(%arg0: i32, %arg1: i32, %arg2: i32) -> (i32, i32) {
    %c0_i32 = arith.constant 0 : i32
    %c0_i32_0 = arith.constant 0 : i32
    return %c0_i32, %arg1 : i32, i32
  }
  func.func @transform_3(%arg0: i32, %arg1: i32, %arg2: i32) -> (i32, i32) {
    %c0_i32 = arith.constant 0 : i32
    return %arg0, %arg1 : i32, i32
  }
}

module attributes {stable_mosaic.version = 11 : i64} {
  func.func @_flash_attn_kernel(%arg0: i32, %arg1: i32, %arg2: i32, %arg3: memref<8x8x8xf32, #tpu.memory_space<vmem>>, %arg4: memref<8x8x8xf32, #tpu.memory_space<vmem>>, %arg5: memref<8x8x8xf32, #tpu.memory_space<vmem>>, %arg6: memref<8x8x8xf32, #tpu.memory_space<vmem>>, %arg7: memref<8x8x1xf32, #tpu.memory_space<vmem>>, %arg8: memref<8x8x1xf32, #tpu.memory_space<vmem>>, %arg9: memref<8x8x8xf32, #tpu.memory_space<vmem>>) attributes {dimension_semantics = [#tpu.dimension_semantics<parallel>, #tpu.dimension_semantics<parallel>, #tpu.dimension_semantics<arbitrary>], iteration_bounds = array<i64: 1, 1, 1>, scalar_prefetch = 0 : i64, scratch_operands = 3 : i64, tpu.core_type = #tpu.core_type<tc>, window_params = [{transform_indices = @transform_0, window_bounds = array<i64: 8, 8, 8>}, {transform_indices = @transform_1, window_bounds = array<i64: 8, 8, 8>}, {transform_indices = @transform_2, window_bounds = array<i64: 8, 8, 8>}, {transform_indices = @transform_3, window_bounds = array<i64: 8, 8, 8>}]} {
    %c0_i32 = arith.constant 0 : i32
    %0 = arith.cmpi eq, %arg2, %c0_i32 : i32
    %1 = arith.extui %0 : i1 to i32
    %c0_i32_0 = arith.constant 0 : i32
    %2 = arith.cmpi ne, %1, %c0_i32_0 : i32
    scf.if %2 {
      %cst = arith.constant 0xFF800000 : f32
      %12 = vector.broadcast %cst : f32 to vector<8x8x1xf32>
      %c0 = arith.constant 0 : index
      %c0_5 = arith.constant 0 : index
      %c0_6 = arith.constant 0 : index
      %13 = vector.load %arg7[%c0, %c0_5, %c0_6] : memref<8x8x1xf32, #tpu.memory_space<vmem>>, vector<8x8x1xf32>
      tpu.vector_store %arg7[%c0, %c0_5, %c0_6], %12 {strides = array<i32>} : memref<8x8x1xf32, #tpu.memory_space<vmem>>, vector<8x8x1xf32>,
      %cst_7 = arith.constant 0.000000e+00 : f32
      %14 = vector.broadcast %cst_7 : f32 to vector<8x8x1xf32>
      %c0_8 = arith.constant 0 : index
      %c0_9 = arith.constant 0 : index
      %c0_10 = arith.constant 0 : index
      %15 = vector.load %arg8[%c0_8, %c0_9, %c0_10] : memref<8x8x1xf32, #tpu.memory_space<vmem>>, vector<8x8x1xf32>
      tpu.vector_store %arg8[%c0_8, %c0_9, %c0_10], %14 {strides = array<i32>} : memref<8x8x1xf32, #tpu.memory_space<vmem>>, vector<8x8x1xf32>,
      %cst_11 = arith.constant 0.000000e+00 : f32
      %16 = vector.broadcast %cst_11 : f32 to vector<8x8x8xf32>
      %c0_12 = arith.constant 0 : index
      %c0_13 = arith.constant 0 : index
      %c0_14 = arith.constant 0 : index
      %17 = vector.load %arg9[%c0_12, %c0_13, %c0_14] : memref<8x8x8xf32, #tpu.memory_space<vmem>>, vector<8x8x8xf32>
      tpu.vector_store %arg9[%c0_12, %c0_13, %c0_14], %16 {strides = array<i32>} : memref<8x8x8xf32, #tpu.memory_space<vmem>>, vector<8x8x8xf32>,
    } else {
    }
    %c8_i32 = arith.constant 8 : i32
    %3 = arith.muli %arg1, %c8_i32 : i32
    %c8_i32_1 = arith.constant 8 : i32
    %4 = arith.muli %arg2, %c8_i32_1 : i32
    %c7_i32 = arith.constant 7 : i32
    %5 = arith.addi %3, %c7_i32 : i32
    %6 = arith.cmpi sle, %4, %5 : i32
    %7 = arith.extui %6 : i1 to i32
    %c0_i32_2 = arith.constant 0 : i32
    %8 = arith.cmpi ne, %7, %c0_i32_2 : i32
    scf.if %8 {
      %c0 = arith.constant 0 : index
      %c0_5 = arith.constant 0 : index
      %c0_6 = arith.constant 0 : index
      %12 = vector.load %arg3[%c0, %c0_5, %c0_6] : memref<8x8x8xf32, #tpu.memory_space<vmem>>, vector<8x8x8xf32>
      %13 = arith.truncf %12 : vector<8x8x8xf32> to vector<8x8x8xbf16>
      %c0_7 = arith.constant 0 : index
      %c0_8 = arith.constant 0 : index
      %c0_9 = arith.constant 0 : index
      %14 = vector.load %arg4[%c0_7, %c0_8, %c0_9] : memref<8x8x8xf32, #tpu.memory_space<vmem>>, vector<8x8x8xf32>
      %15 = arith.truncf %14 : vector<8x8x8xf32> to vector<8x8x8xbf16>
      "tpu.trace_start"() <{level = 10 : i32, message = "hqd,hkd->hqk"}> : () -> ()
      %cst = arith.constant dense<0.000000e+00> : vector<8x8x8xf32>
      %16 = tpu.matmul %13, %15, %cst {dimension_numbers = #tpu.dot_dimension_numbers<[2], [2], [1], [1], [0, 0, 0, 1, 1, 1], [0], [0]>} : vector<8x8x8xbf16>, vector<8x8x8xbf16>, vector<8x8x8xf32> -> vector<8x8x8xf32>
      "tpu.trace_stop"() : () -> ()
      %cst_10 = arith.constant 0.353553385 : f32
      %17 = vector.broadcast %cst_10 : f32 to vector<8x8x8xf32>
      %18 = arith.mulf %16, %17 : vector<8x8x8xf32>
      %19 = tpu.iota {dimensions = array<i32: 1>} : vector<8x8x8xi32>
      %20 = vector.broadcast %3 : i32 to vector<8x8x8xi32>
      %21 = arith.addi %20, %19 : vector<8x8x8xi32>
      %22 = tpu.iota {dimensions = array<i32: 2>} : vector<8x8x8xi32>
      %23 = vector.broadcast %4 : i32 to vector<8x8x8xi32>
      %24 = arith.addi %23, %22 : vector<8x8x8xi32>
      %25 = arith.cmpi sgt, %24, %21 : vector<8x8x8xi32>
      %cst_11 = arith.constant 0xFF800000 : f32
      %26 = vector.broadcast %cst_11 : f32 to vector<8x8x8xf32>
      %27 = arith.select %25, %26, %18 : vector<8x8x8xi1>, vector<8x8x8xf32>
      %c0_12 = arith.constant 0 : index
      %c0_13 = arith.constant 0 : index
      %c0_14 = arith.constant 0 : index
      %28 = vector.load %arg7[%c0_12, %c0_13, %c0_14] : memref<8x8x1xf32, #tpu.memory_space<vmem>>, vector<8x8x1xf32>
      %cst_15 = arith.constant dense<0xFF800000> : vector<8x8xf32>
      %29 = vector.multi_reduction <maximumf>, %27, %cst_15 [2] : vector<8x8x8xf32> to vector<8x8xf32>
      %30 = vector.shape_cast %29 : vector<8x8xf32> to vector<8x8x1xf32>
      %31 = arith.maximumf %28, %30 : vector<8x8x1xf32>
      %32 = arith.subf %28, %31 : vector<8x8x1xf32>
      %33 = math.exp %32 : vector<8x8x1xf32>
      %34 = vector.broadcast %31 : vector<8x8x1xf32> to vector<8x8x8xf32>
      %35 = arith.subf %27, %34 : vector<8x8x8xf32>
      %36 = math.exp %35 : vector<8x8x8xf32>
      %c0_16 = arith.constant 0 : index
      %c0_17 = arith.constant 0 : index
      %c0_18 = arith.constant 0 : index
      %37 = vector.load %arg8[%c0_16, %c0_17, %c0_18] : memref<8x8x1xf32, #tpu.memory_space<vmem>>, vector<8x8x1xf32>
      %38 = arith.mulf %33, %37 : vector<8x8x1xf32>
      %cst_19 = arith.constant dense<0.000000e+00> : vector<8x8xf32>
      %39 = vector.multi_reduction <add>, %36, %cst_19 [2] : vector<8x8x8xf32> to vector<8x8xf32>
      %40 = vector.shape_cast %39 : vector<8x8xf32> to vector<8x8x1xf32>
      %41 = arith.addf %38, %40 : vector<8x8x1xf32>
      %c0_20 = arith.constant 0 : index
      %c0_21 = arith.constant 0 : index
      %c0_22 = arith.constant 0 : index
      %42 = vector.load %arg8[%c0_20, %c0_21, %c0_22] : memref<8x8x1xf32, #tpu.memory_space<vmem>>, vector<8x8x1xf32>
      tpu.vector_store %arg8[%c0_20, %c0_21, %c0_22], %41 {strides = array<i32>} : memref<8x8x1xf32, #tpu.memory_space<vmem>>, vector<8x8x1xf32>,
      %c0_23 = arith.constant 0 : index
      %c0_24 = arith.constant 0 : index
      %c0_25 = arith.constant 0 : index
      %43 = vector.load %arg9[%c0_23, %c0_24, %c0_25] : memref<8x8x8xf32, #tpu.memory_space<vmem>>, vector<8x8x8xf32>
      %44 = vector.broadcast %33 : vector<8x8x1xf32> to vector<8x8x8xf32>
      %45 = arith.mulf %44, %43 : vector<8x8x8xf32>
      %46 = arith.truncf %36 : vector<8x8x8xf32> to vector<8x8x8xbf16>
      %c0_26 = arith.constant 0 : index
      %c0_27 = arith.constant 0 : index
      %c0_28 = arith.constant 0 : index
      %47 = vector.load %arg5[%c0_26, %c0_27, %c0_28] : memref<8x8x8xf32, #tpu.memory_space<vmem>>, vector<8x8x8xf32>
      %48 = arith.truncf %47 : vector<8x8x8xf32> to vector<8x8x8xbf16>
      "tpu.trace_start"() <{level = 10 : i32, message = "hqk,hkd->hqd"}> : () -> ()
      %cst_29 = arith.constant dense<0.000000e+00> : vector<8x8x8xf32>
      %49 = tpu.matmul %46, %48, %cst_29 {dimension_numbers = #tpu.dot_dimension_numbers<[2], [1], [1], [2], [0, 0, 0, 1, 1, 2], [0], [0]>} : vector<8x8x8xbf16>, vector<8x8x8xbf16>, vector<8x8x8xf32> -> vector<8x8x8xf32>
      "tpu.trace_stop"() : () -> ()
      %50 = arith.addf %45, %49 : vector<8x8x8xf32>
      %c0_30 = arith.constant 0 : index
      %c0_31 = arith.constant 0 : index
      %c0_32 = arith.constant 0 : index
      %51 = vector.load %arg9[%c0_30, %c0_31, %c0_32] : memref<8x8x8xf32, #tpu.memory_space<vmem>>, vector<8x8x8xf32>
      tpu.vector_store %arg9[%c0_30, %c0_31, %c0_32], %50 {strides = array<i32>} : memref<8x8x8xf32, #tpu.memory_space<vmem>>, vector<8x8x8xf32>,
      %c0_33 = arith.constant 0 : index
      %c0_34 = arith.constant 0 : index
      %c0_35 = arith.constant 0 : index
      %52 = vector.load %arg7[%c0_33, %c0_34, %c0_35] : memref<8x8x1xf32, #tpu.memory_space<vmem>>, vector<8x8x1xf32>
      tpu.vector_store %arg7[%c0_33, %c0_34, %c0_35], %31 {strides = array<i32>} : memref<8x8x1xf32, #tpu.memory_space<vmem>>, vector<8x8x1xf32>,
    } else {
    }
    %c0_i32_3 = arith.constant 0 : i32
    %9 = arith.cmpi eq, %arg2, %c0_i32_3 : i32
    %10 = arith.extui %9 : i1 to i32
    %c0_i32_4 = arith.constant 0 : i32
    %11 = arith.cmpi ne, %10, %c0_i32_4 : i32
    scf.if %11 {
      %c0 = arith.constant 0 : index
      %c0_5 = arith.constant 0 : index
      %c0_6 = arith.constant 0 : index
      %12 = vector.load %arg8[%c0, %c0_5, %c0_6] : memref<8x8x1xf32, #tpu.memory_space<vmem>>, vector<8x8x1xf32>
      %13 = tpu.reciprocal %12 {approx = true} : vector<8x8x1xf32> -> vector<8x8x1xf32>
      %c0_7 = arith.constant 0 : index
      %c0_8 = arith.constant 0 : index
      %c0_9 = arith.constant 0 : index
      %14 = vector.load %arg9[%c0_7, %c0_8, %c0_9] : memref<8x8x8xf32, #tpu.memory_space<vmem>>, vector<8x8x8xf32>
      %15 = vector.broadcast %13 : vector<8x8x1xf32> to vector<8x8x8xf32>
      %16 = arith.mulf %14, %15 : vector<8x8x8xf32>
      %c0_10 = arith.constant 0 : index
      %c0_11 = arith.constant 0 : index
      %c0_12 = arith.constant 0 : index
      %17 = vector.load %arg6[%c0_10, %c0_11, %c0_12] : memref<8x8x8xf32, #tpu.memory_space<vmem>>, vector<8x8x8xf32>
      tpu.vector_store %arg6[%c0_10, %c0_11, %c0_12], %16 {strides = array<i32>} : memref<8x8x8xf32, #tpu.memory_space<vmem>>, vector<8x8x8xf32>,
    } else {
    }
    return
  }
  func.func @transform_0(%arg0: i32, %arg1: i32, %arg2: i32) -> (i32, i32, i32) {
    %c0_i32 = arith.constant 0 : i32
    %c0_i32_0 = arith.constant 0 : i32
    return %arg0, %arg1, %c0_i32 : i32, i32, i32
  }
  func.func @transform_1(%arg0: i32, %arg1: i32, %arg2: i32) -> (i32, i32, i32) {
    %c0_i32 = arith.constant 0 : i32
    %c0_i32_0 = arith.constant 0 : i32
    return %arg0, %arg2, %c0_i32 : i32, i32, i32
  }
  func.func @transform_2(%arg0: i32, %arg1: i32, %arg2: i32) -> (i32, i32, i32) {
    %c0_i32 = arith.constant 0 : i32
    %c0_i32_0 = arith.constant 0 : i32
    return %arg0, %arg2, %c0_i32 : i32, i32, i32
  }
  func.func @transform_3(%arg0: i32, %arg1: i32, %arg2: i32) -> (i32, i32, i32) {
    %c0_i32 = arith.constant 0 : i32
    %c0_i32_0 = arith.constant 0 : i32
    return %arg0, %arg1, %c0_i32 : i32, i32, i32
  }
}

module attributes {stable_mosaic.version = 11 : i64} {
  func.func @_linear_kernel(%arg0: i32, %arg1: i32, %arg2: i32, %arg3: memref<16x32xf32, #tpu.memory_space<vmem>>, %arg4: memref<32x32xbf16, #tpu.memory_space<vmem>>, %arg5: memref<1x32xf32, #tpu.memory_space<vmem>>, %arg6: memref<16x32xf32, #tpu.memory_space<vmem>>, %arg7: memref<16x32xf32, #tpu.memory_space<vmem>>, %arg8: memref<16x32xf32, #tpu.memory_space<vmem>>) attributes {dimension_semantics = [#tpu.dimension_semantics<parallel>, #tpu.dimension_semantics<parallel>, #tpu.dimension_semantics<arbitrary>], iteration_bounds = array<i64: 1, 1, 1>, scalar_prefetch = 0 : i64, scratch_operands = 1 : i64, tpu.core_type = #tpu.core_type<tc>, window_params = [{transform_indices = @transform_0, window_bounds = array<i64: 16, 32>}, {transform_indices = @transform_1, window_bounds = array<i64: 32, 32>}, {transform_indices = @transform_2, window_bounds = array<i64: 1, 32>}, {transform_indices = @transform_3, window_bounds = array<i64: 16, 32>}, {transform_indices = @transform_4, window_bounds = array<i64: 16, 32>}]} {
    %c0_i32 = arith.constant 0 : i32
    %0 = arith.cmpi eq, %arg2, %c0_i32 : i32
    %1 = arith.extui %0 : i1 to i32
    %c0_i32_0 = arith.constant 0 : i32
    %2 = arith.cmpi ne, %1, %c0_i32_0 : i32
    scf.if %2 {
      %cst_10 = arith.constant 0.000000e+00 : f32
      %13 = vector.broadcast %cst_10 : f32 to vector<16x32xf32>
      %c0_11 = arith.constant 0 : index
      %c0_12 = arith.constant 0 : index
      %14 = vector.load %arg8[%c0_11, %c0_12] : memref<16x32xf32, #tpu.memory_space<vmem>>, vector<16x32xf32>
      tpu.vector_store %arg8[%c0_11, %c0_12], %13 {strides = array<i32>} : memref<16x32xf32, #tpu.memory_space<vmem>>, vector<16x32xf32>,
    } else {
    }
    %c0 = arith.constant 0 : index
    %c0_1 = arith.constant 0 : index
    %3 = vector.load %arg8[%c0, %c0_1] : memref<16x32xf32, #tpu.memory_space<vmem>>, vector<16x32xf32>
    %c0_2 = arith.constant 0 : index
    %c0_3 = arith.constant 0 : index
    %4 = vector.load %arg3[%c0_2, %c0_3] : memref<16x32xf32, #tpu.memory_space<vmem>>, vector<16x32xf32>
    %5 = arith.truncf %4 : vector<16x32xf32> to vector<16x32xbf16>
    %c0_4 = arith.constant 0 : index
    %c0_5 = arith.constant 0 : index
    %6 = vector.load %arg4[%c0_4, %c0_5] : memref<32x32xbf16, #tpu.memory_space<vmem>>, vector<32x32xbf16>
    %cst = arith.constant dense<0.000000e+00> : vector<16x32xf32>
    %7 = tpu.matmul %5, %6, %cst {dimension_numbers = #tpu.dot_dimension_numbers<[1], [0], [0], [1], [0, 0, 1, 1], [], []>} : vector<16x32xbf16>, vector<32x32xbf16>, vector<16x32xf32> -> vector<16x32xf32>
    %8 = arith.addf %3, %7 : vector<16x32xf32>
    %c0_6 = arith.constant 0 : index
    %c0_7 = arith.constant 0 : index
    %9 = vector.load %arg8[%c0_6, %c0_7] : memref<16x32xf32, #tpu.memory_space<vmem>>, vector<16x32xf32>
    tpu.vector_store %arg8[%c0_6, %c0_7], %8 {strides = array<i32>} : memref<16x32xf32, #tpu.memory_space<vmem>>, vector<16x32xf32>,
    %c0_i32_8 = arith.constant 0 : i32
    %10 = arith.cmpi eq, %arg2, %c0_i32_8 : i32
    %11 = arith.extui %10 : i1 to i32
    %c0_i32_9 = arith.constant 0 : i32
    %12 = arith.cmpi ne, %11, %c0_i32_9 : i32
    scf.if %12 {
      %c0_10 = arith.constant 0 : index
      %c0_11 = arith.constant 0 : index
      %13 = vector.load %arg8[%c0_10, %c0_11] : memref<16x32xf32, #tpu.memory_space<vmem>>, vector<16x32xf32>
      %c0_12 = arith.constant 0 : index
      %c0_13 = arith.constant 0 : index
      %14 = vector.load %arg5[%c0_12, %c0_13] : memref<1x32xf32, #tpu.memory_space<vmem>>, vector<1x32xf32>
      %15 = vector.broadcast %14 : vector<1x32xf32> to vector<16x32xf32>
      %16 = arith.addf %13, %15 : vector<16x32xf32>
      %c0_14 = arith.constant 0 : index
      %c0_15 = arith.constant 0 : index
      %17 = vector.load %arg6[%c0_14, %c0_15] : memref<16x32xf32, #tpu.memory_space<vmem>>, vector<16x32xf32>
      %18 = arith.addf %16, %17 : vector<16x32xf32>
      %c0_16 = arith.constant 0 : index
      %c0_17 = arith.constant 0 : index
      %19 = vector.load %arg7[%c0_16, %c0_17] : memref<16x32xf32, #tpu.memory_space<vmem>>, vector<16x32xf32>
      tpu.vector_store %arg7[%c0_16, %c0_17], %18 {strides = array<i32>} : memref<16x32xf32, #tpu.memory_space<vmem>>, vector<16x32xf32>,
    } else {
    }
    return
  }
  func.func @transform_0(%arg0: i32, %arg1: i32, %arg2: i32) -> (i32, i32) {
    %c0_i32 = arith.constant 0 : i32
    return %arg0, %arg2 : i32, i32
  }
  func.func @transform_1(%arg0: i32, %arg1: i32, %arg2: i32) -> (i32, i32) {
    %c0_i32 = arith.constant 0 : i32
    return %arg2, %arg1 : i32, i32
  }
  func.func @transform_2(%arg0: i32, %arg1: i32, %arg2: i32) -> (i32, i32) {
    %c0_i32 = arith.constant 0 : i32
    %c0_i32_0 = arith.constant 0 : i32
    return %c0_i32, %arg1 : i32, i32
  }
  func.func @transform_3(%arg0: i32, %arg1: i32, %arg2: i32) -> (i32, i32) {
    %c0_i32 = arith.constant 0 : i32
    return %arg0, %arg1 : i32, i32
  }
  func.func @transform_4(%arg0: i32, %arg1: i32, %arg2: i32) -> (i32, i32) {
    %c0_i32 = arith.constant 0 : i32
    return %arg0, %arg1 : i32, i32
  }
}

module attributes {stable_mosaic.version = 11 : i64} {
  func.func @_mlp_kernel(%arg0: i32, %arg1: i32, %arg2: memref<16x32xf32, #tpu.memory_space<vmem>>, %arg3: memref<32x128xbf16, #tpu.memory_space<vmem>>, %arg4: memref<1x128xf32, #tpu.memory_space<vmem>>, %arg5: memref<128x32xbf16, #tpu.memory_space<vmem>>, %arg6: memref<1x32xf32, #tpu.memory_space<vmem>>, %arg7: memref<16x32xf32, #tpu.memory_space<vmem>>, %arg8: memref<16x32xf32, #tpu.memory_space<vmem>>) attributes {dimension_semantics = [#tpu.dimension_semantics<parallel>, #tpu.dimension_semantics<arbitrary>], iteration_bounds = array<i64: 1, 1>, scalar_prefetch = 0 : i64, scratch_operands = 1 : i64, tpu.core_type = #tpu.core_type<tc>, window_params = [{transform_indices = @transform_0, window_bounds = array<i64: 16, 32>}, {transform_indices = @transform_1, window_bounds = array<i64: 32, 128>}, {transform_indices = @transform_2, window_bounds = array<i64: 1, 128>}, {transform_indices = @transform_3, window_bounds = array<i64: 128, 32>}, {pipeline_mode = #tpu.pipeline_mode<synchronous>, transform_indices = @transform_4, window_bounds = array<i64: 1, 32>}, {transform_indices = @transform_5, window_bounds = array<i64: 16, 32>}]} {
    %c0_i32 = arith.constant 0 : i32
    %0 = arith.cmpi eq, %arg1, %c0_i32 : i32
    %1 = arith.extui %0 : i1 to i32
    %c0_i32_0 = arith.constant 0 : i32
    %2 = arith.cmpi ne, %1, %c0_i32_0 : i32
    scf.if %2 {
      %cst_19 = arith.constant 0.000000e+00 : f32
      %32 = vector.broadcast %cst_19 : f32 to vector<16x32xf32>
      %c0_20 = arith.constant 0 : index
      %c0_21 = arith.constant 0 : index
      %33 = vector.load %arg8[%c0_20, %c0_21] : memref<16x32xf32, #tpu.memory_space<vmem>>, vector<16x32xf32>
      tpu.vector_store %arg8[%c0_20, %c0_21], %32 {strides = array<i32>} : memref<16x32xf32, #tpu.memory_space<vmem>>, vector<16x32xf32>,
    } else {
    }
    %c0 = arith.constant 0 : index
    %c0_1 = arith.constant 0 : index
    %3 = vector.load %arg2[%c0, %c0_1] : memref<16x32xf32, #tpu.memory_space<vmem>>, vector<16x32xf32>
    %4 = arith.truncf %3 : vector<16x32xf32> to vector<16x32xbf16>
    %c0_2 = arith.constant 0 : index
    %c0_3 = arith.constant 0 : index
    %5 = vector.load %arg3[%c0_2, %c0_3] : memref<32x128xbf16, #tpu.memory_space<vmem>>, vector<32x128xbf16>
    %cst = arith.constant dense<0.000000e+00> : vector<16x128xf32>
    %6 = tpu.matmul %4, %5, %cst {dimension_numbers = #tpu.dot_dimension_numbers<[1], [0], [0], [1], [0, 0, 1, 1], [], []>} : vector<16x32xbf16>, vector<32x128xbf16>, vector<16x128xf32> -> vector<16x128xf32>
    %c0_4 = arith.constant 0 : index
    %c0_5 = arith.constant 0 : index
    %7 = vector.load %arg4[%c0_4, %c0_5] : memref<1x128xf32, #tpu.memory_space<vmem>>, vector<1x128xf32>
    %8 = vector.broadcast %7 : vector<1x128xf32> to vector<16x128xf32>
    %9 = arith.addf %6, %8 : vector<16x128xf32>
    %cst_6 = arith.constant 5.000000e-01 : f32
    %10 = vector.broadcast %cst_6 : f32 to vector<16x128xf32>
    %11 = arith.mulf %10, %9 : vector<16x128xf32>
    %cst_7 = arith.constant 4.471500e-02 : f32
    %12 = vector.broadcast %cst_7 : f32 to vector<16x128xf32>
    %13 = arith.mulf %12, %9 : vector<16x128xf32>
    %14 = arith.mulf %13, %9 : vector<16x128xf32>
    %15 = arith.mulf %14, %9 : vector<16x128xf32>
    %16 = arith.addf %9, %15 : vector<16x128xf32>
    %cst_8 = arith.constant 0.797884583 : f32
    %17 = vector.broadcast %cst_8 : f32 to vector<16x128xf32>
    %18 = arith.mulf %17, %16 : vector<16x128xf32>
    %19 = math.tanh %18 : vector<16x128xf32>
    %cst_9 = arith.constant 1.000000e+00 : f32
    %20 = vector.broadcast %cst_9 : f32 to vector<16x128xf32>
    %21 = arith.addf %20, %19 : vector<16x128xf32>
    %22 = arith.mulf %11, %21 : vector<16x128xf32>
    %c0_10 = arith.constant 0 : index
    %c0_11 = arith.constant 0 : index
    %23 = vector.load %arg8[%c0_10, %c0_11] : memref<16x32xf32, #tpu.memory_space<vmem>>, vector<16x32xf32>
    %24 = arith.truncf %22 : vector<16x128xf32> to vector<16x128xbf16>
    %c0_12 = arith.constant 0 : index
    %c0_13 = arith.constant 0 : index
    %25 = vector.load %arg5[%c0_12, %c0_13] : memref<128x32xbf16, #tpu.memory_space<vmem>>, vector<128x32xbf16>
    %cst_14 = arith.constant dense<0.000000e+00> : vector<16x32xf32>
    %26 = tpu.matmul %24, %25, %cst_14 {dimension_numbers = #tpu.dot_dimension_numbers<[1], [0], [0], [1], [0, 0, 1, 1], [], []>} : vector<16x128xbf16>, vector<128x32xbf16>, vector<16x32xf32> -> vector<16x32xf32>
    %27 = arith.addf %23, %26 : vector<16x32xf32>
    %c0_15 = arith.constant 0 : index
    %c0_16 = arith.constant 0 : index
    %28 = vector.load %arg8[%c0_15, %c0_16] : memref<16x32xf32, #tpu.memory_space<vmem>>, vector<16x32xf32>
    tpu.vector_store %arg8[%c0_15, %c0_16], %27 {strides = array<i32>} : memref<16x32xf32, #tpu.memory_space<vmem>>, vector<16x32xf32>,
    %c0_i32_17 = arith.constant 0 : i32
    %29 = arith.cmpi eq, %arg1, %c0_i32_17 : i32
    %30 = arith.extui %29 : i1 to i32
    %c0_i32_18 = arith.constant 0 : i32
    %31 = arith.cmpi ne, %30, %c0_i32_18 : i32
    scf.if %31 {
      %c0_19 = arith.constant 0 : index
      %c0_20 = arith.constant 0 : index
      %32 = vector.load %arg8[%c0_19, %c0_20] : memref<16x32xf32, #tpu.memory_space<vmem>>, vector<16x32xf32>
      %c0_21 = arith.constant 0 : index
      %c0_22 = arith.constant 0 : index
      %33 = vector.load %arg6[%c0_21, %c0_22] : memref<1x32xf32, #tpu.memory_space<vmem>>, vector<1x32xf32>
      %34 = vector.broadcast %33 : vector<1x32xf32> to vector<16x32xf32>
      %35 = arith.addf %32, %34 : vector<16x32xf32>
      %c0_23 = arith.constant 0 : index
      %c0_24 = arith.constant 0 : index
      %36 = vector.load %arg2[%c0_23, %c0_24] : memref<16x32xf32, #tpu.memory_space<vmem>>, vector<16x32xf32>
      %37 = arith.addf %35, %36 : vector<16x32xf32>
      %c0_25 = arith.constant 0 : index
      %c0_26 = arith.constant 0 : index
      %38 = vector.load %arg7[%c0_25, %c0_26] : memref<16x32xf32, #tpu.memory_space<vmem>>, vector<16x32xf32>
      tpu.vector_store %arg7[%c0_25, %c0_26], %37 {strides = array<i32>} : memref<16x32xf32, #tpu.memory_space<vmem>>, vector<16x32xf32>,
    } else {
    }
    return
  }
  func.func @transform_0(%arg0: i32, %arg1: i32) -> (i32, i32) {
    %c0_i32 = arith.constant 0 : i32
    %c0_i32_0 = arith.constant 0 : i32
    return %arg0, %c0_i32 : i32, i32
  }
  func.func @transform_1(%arg0: i32, %arg1: i32) -> (i32, i32) {
    %c0_i32 = arith.constant 0 : i32
    %c0_i32_0 = arith.constant 0 : i32
    return %c0_i32, %arg1 : i32, i32
  }
  func.func @transform_2(%arg0: i32, %arg1: i32) -> (i32, i32) {
    %c0_i32 = arith.constant 0 : i32
    %c0_i32_0 = arith.constant 0 : i32
    return %c0_i32, %arg1 : i32, i32
  }
  func.func @transform_3(%arg0: i32, %arg1: i32) -> (i32, i32) {
    %c0_i32 = arith.constant 0 : i32
    %c0_i32_0 = arith.constant 0 : i32
    return %arg1, %c0_i32 : i32, i32
  }
  func.func @transform_4(%arg0: i32, %arg1: i32) -> (i32, i32) {
    %c0_i32 = arith.constant 0 : i32
    %c0_i32_0 = arith.constant 0 : i32
    %c0_i32_1 = arith.constant 0 : i32
    return %c0_i32, %c0_i32_0 : i32, i32
  }
  func.func @transform_5(%arg0: i32, %arg1: i32) -> (i32, i32) {
    %c0_i32 = arith.constant 0 : i32
    %c0_i32_0 = arith.constant 0 : i32
    return %arg0, %c0_i32 : i32, i32
  }
}

module attributes {stable_mosaic.version = 11 : i64} {
  func.func @_linear_kernel(%arg0: i32, %arg1: i32, %arg2: i32, %arg3: memref<16x32xf32, #tpu.memory_space<vmem>>, %arg4: memref<32x8xbf16, #tpu.memory_space<vmem>>, %arg5: memref<1x8xf32, #tpu.memory_space<vmem>>, %arg6: memref<16x8xf32, #tpu.memory_space<vmem>>, %arg7: memref<16x8xf32, #tpu.memory_space<vmem>>) attributes {dimension_semantics = [#tpu.dimension_semantics<parallel>, #tpu.dimension_semantics<parallel>, #tpu.dimension_semantics<arbitrary>], iteration_bounds = array<i64: 1, 1, 1>, scalar_prefetch = 0 : i64, scratch_operands = 1 : i64, tpu.core_type = #tpu.core_type<tc>, window_params = [{transform_indices = @transform_0, window_bounds = array<i64: 16, 32>}, {transform_indices = @transform_1, window_bounds = array<i64: 32, 8>}, {transform_indices = @transform_2, window_bounds = array<i64: 1, 8>}, {transform_indices = @transform_3, window_bounds = array<i64: 16, 8>}]} {
    %c0_i32 = arith.constant 0 : i32
    %0 = arith.cmpi eq, %arg2, %c0_i32 : i32
    %1 = arith.extui %0 : i1 to i32
    %c0_i32_0 = arith.constant 0 : i32
    %2 = arith.cmpi ne, %1, %c0_i32_0 : i32
    scf.if %2 {
      %cst_10 = arith.constant 0.000000e+00 : f32
      %13 = vector.broadcast %cst_10 : f32 to vector<16x8xf32>
      %c0_11 = arith.constant 0 : index
      %c0_12 = arith.constant 0 : index
      %14 = vector.load %arg7[%c0_11, %c0_12] : memref<16x8xf32, #tpu.memory_space<vmem>>, vector<16x8xf32>
      tpu.vector_store %arg7[%c0_11, %c0_12], %13 {strides = array<i32>} : memref<16x8xf32, #tpu.memory_space<vmem>>, vector<16x8xf32>,
    } else {
    }
    %c0 = arith.constant 0 : index
    %c0_1 = arith.constant 0 : index
    %3 = vector.load %arg7[%c0, %c0_1] : memref<16x8xf32, #tpu.memory_space<vmem>>, vector<16x8xf32>
    %c0_2 = arith.constant 0 : index
    %c0_3 = arith.constant 0 : index
    %4 = vector.load %arg3[%c0_2, %c0_3] : memref<16x32xf32, #tpu.memory_space<vmem>>, vector<16x32xf32>
    %5 = arith.truncf %4 : vector<16x32xf32> to vector<16x32xbf16>
    %c0_4 = arith.constant 0 : index
    %c0_5 = arith.constant 0 : index
    %6 = vector.load %arg4[%c0_4, %c0_5] : memref<32x8xbf16, #tpu.memory_space<vmem>>, vector<32x8xbf16>
    %cst = arith.constant dense<0.000000e+00> : vector<16x8xf32>
    %7 = tpu.matmul %5, %6, %cst {dimension_numbers = #tpu.dot_dimension_numbers<[1], [0], [0], [1], [0, 0, 1, 1], [], []>} : vector<16x32xbf16>, vector<32x8xbf16>, vector<16x8xf32> -> vector<16x8xf32>
    %8 = arith.addf %3, %7 : vector<16x8xf32>
    %c0_6 = arith.constant 0 : index
    %c0_7 = arith.constant 0 : index
    %9 = vector.load %arg7[%c0_6, %c0_7] : memref<16x8xf32, #tpu.memory_space<vmem>>, vector<16x8xf32>
    tpu.vector_store %arg7[%c0_6, %c0_7], %8 {strides = array<i32>} : memref<16x8xf32, #tpu.memory_space<vmem>>, vector<16x8xf32>,
    %c0_i32_8 = arith.constant 0 : i32
    %10 = arith.cmpi eq, %arg2, %c0_i32_8 : i32
    %11 = arith.extui %10 : i1 to i32
    %c0_i32_9 = arith.constant 0 : i32
    %12 = arith.cmpi ne, %11, %c0_i32_9 : i32
    scf.if %12 {
      %c0_10 = arith.constant 0 : index
      %c0_11 = arith.constant 0 : index
      %13 = vector.load %arg7[%c0_10, %c0_11] : memref<16x8xf32, #tpu.memory_space<vmem>>, vector<16x8xf32>
      %c0_12 = arith.constant 0 : index
      %c0_13 = arith.constant 0 : index
      %14 = vector.load %arg5[%c0_12, %c0_13] : memref<1x8xf32, #tpu.memory_space<vmem>>, vector<1x8xf32>
      %15 = vector.broadcast %14 : vector<1x8xf32> to vector<16x8xf32>
      %16 = arith.addf %13, %15 : vector<16x8xf32>
      %c0_14 = arith.constant 0 : index
      %c0_15 = arith.constant 0 : index
      %17 = vector.load %arg6[%c0_14, %c0_15] : memref<16x8xf32, #tpu.memory_space<vmem>>, vector<16x8xf32>
      tpu.vector_store %arg6[%c0_14, %c0_15], %16 {strides = array<i32>} : memref<16x8xf32, #tpu.memory_space<vmem>>, vector<16x8xf32>,
    } else {
    }
    return
  }
  func.func @transform_0(%arg0: i32, %arg1: i32, %arg2: i32) -> (i32, i32) {
    %c0_i32 = arith.constant 0 : i32
    return %arg0, %arg2 : i32, i32
  }
  func.func @transform_1(%arg0: i32, %arg1: i32, %arg2: i32) -> (i32, i32) {
    %c0_i32 = arith.constant 0 : i32
    return %arg2, %arg1 : i32, i32
  }
  func.func @transform_2(%arg0: i32, %arg1: i32, %arg2: i32) -> (i32, i32) {
    %c0_i32 = arith.constant 0 : i32
    %c0_i32_0 = arith.constant 0 : i32
    return %c0_i32, %arg1 : i32, i32
  }
  func.func @transform_3(%arg0: i32, %arg1: i32, %arg2: i32) -> (i32, i32) {
    %c0_i32 = arith.constant 0 : i32
    return %arg0, %arg1 : i32, i32
  }
}

</mosaic_0001>

<llo_original>
// kernel: transformer_forward.11
$region0: #{transformer_forward.11}
  #allocation0 [shape = 'u32[]', space=smem, size = 0x4, offset = 0x4, fixed_abs, tag = 'smem constant byte address 0x4 - core index']
  #allocation1 [shape = 'u32[144,128]{1,0:T(1,128)}', space=vmem, size = 0x12000, scoped, tag = 'internal scratch']
  #allocation2 [shape = 'f32[16,96]{1,0:T(8,128)}', space=vmem, size = 0x2000, scoped, tag = 'scratch operand']
  %s0 = inlined_call_operand.vmem [shape: f32[16,32], index: 0, kind: input, shape index: {}]
  %s1 = inlined_call_operand.vmem [shape: bf16[32,96], index: 1, kind: input, shape index: {}]
  %s2 = inlined_call_operand.vmem [shape: f32[1,96], index: 2, kind: input, shape index: {}]
  %s3 = inlined_call_operand.vmem [shape: f32[16,96], index: 3, kind: output, shape index: {}]
  %s4 = sld [smem:[#allocation0]]
  $region30: #{transformer_forward.11} parent=0
    _
  %s6 = ssub.s32 1, %s4
  %s7 = scalar_select 0, %s6, %s4
  // Predicated region
  $region2: #{transformer_forward.11} parent=0 // pred_check
    _
  $region3: #{transformer_forward.11} parent=0 // pred_check_branch
    %9 = sbr.rel (0) target = $region5
  $region4: #{transformer_forward.11} parent=0 // pred_region
    _
  $region5: #{transformer_forward.11} parent=0 // pred_fallthru
    _
  // Predicated region
  $region6: #{transformer_forward.11} parent=0 // pred_check
    _
  $region7: #{transformer_forward.11} parent=0 // pred_check_branch
    %11 = sbr.rel (0) target = $region9
  $region8: #{transformer_forward.11} parent=0 // pred_region
    _
  $region9: #{transformer_forward.11} parent=0 // pred_fallthru
    _
  // Predicated region
  $region10: #{transformer_forward.11} parent=0 // pred_check
    _
  $region11: #{transformer_forward.11} parent=0 // pred_check_branch
    %13 = sbr.rel (0) target = $region13
  $region12: #{transformer_forward.11} parent=0 // pred_region
    _
  $region13: #{transformer_forward.11} parent=0 // pred_fallthru
    _
  %p15 = scmp.eq.s32.totalorder 0, 0
  // Predicated region
  $region14: #{transformer_forward.11} parent=0 // pred_check
    %p16 = pneg %p15
  $region15: #{transformer_forward.11} parent=0 // pred_check_branch
    %18 = sbr.rel (%p16) target = $region17
  $region16: #{transformer_forward.11} parent=0 // pred_region
    %vm19 = vcmask 785408
    %20 = vst.msk [vmem:[#allocation2] sm:$0xff] %vm19, 0.0
    %21 = vst.msk [vmem:[#allocation2 + $0x8] sm:$0xff] %vm19, 0.0
  $region17: #{transformer_forward.11} parent=0 // pred_fallthru
    _
  %v22 = vld [vmem:[#allocation2] sm:$0xff]
  %v23 = vld [vmem:[#allocation2 + $0x8] sm:$0xff]
  %v24 = vld [vmem:[%s0] sm:$0xff]
  %v25 = vld [vmem:[%s0 + $0x8] sm:$0xff]
  %v26 = vpack.c.bf16 %v25, %v24
  %v27 = vld [vmem:[%s1] sm:$0xf]
  %v28 = vld [vmem:[%s1 + $0x4] sm:$0xf]
  %v29 = vld [vmem:[%s1 + $0x8] sm:$0xf]
  %v30 = vld [vmem:[%s1 + $0xc] sm:$0xf]
  %v35 = vunpack.c.l.b16 %v27
  %v36 = vunpack.c.l.b16 %v28
  %v37 = vunpack.c.l.b16 %v29
  %v38 = vunpack.c.l.b16 %v30
  %v39 = vpack.c.b16 %v36, %v35
  %v40 = vpack.c.b16 %v38, %v37
  %vm43 = vcmask 261120
  %v45 = vsel %vm43, %v26, 0
  %47 = vmatprep.subr.bf16.mxu0 0
  %48 = vmatpush1.bf16.msra.mxu0 %v39
  %49 = vmatprep.subr.bf16.mxu0 0
  %50 = vmatpush1.bf16.msra.mxu0 %v40
  %51 = vmatprep.subr.bf16.mxu0 0
  %52 = vmatpush1.bf16.msra.mxu0 0
  %53 = vmatprep.subr.bf16.mxu0 0
  %54 = vmatpush1.bf16.msra.mxu0 0
  %55 = vmatprep.subr.bf16.mxu0 0
  %56 = vmatpush1.bf16.msra.mxu0 0
  %57 = vmatprep.subr.bf16.mxu0 0
  %58 = vmatpush1.bf16.msra.mxu0 0
  %59 = vmatprep.subr.bf16.mxu0 0
  %60 = vmatpush1.bf16.msra.mxu0 0
  %61 = vmatprep.subr.bf16.mxu0 0
  %62 = vmatpush1.bf16.msra.mxu0 0
  %63 = vmatprep.subr.bf16.mxu0 0
  %64 = vmatpush1.bf16.msra.mxu0 0
  %65 = vmatprep.subr.bf16.mxu0 0
  %66 = vmatpush1.bf16.msra.mxu0 0
  %67 = vmatprep.subr.bf16.mxu0 0
  %68 = vmatpush1.bf16.msra.mxu0 0
  %69 = vmatprep.subr.bf16.mxu0 0
  %70 = vmatpush1.bf16.msra.mxu0 0
  %71 = vmatprep.subr.bf16.mxu0 0
  %72 = vmatpush1.bf16.msra.mxu0 0
  %73 = vmatprep.subr.bf16.mxu0 0
  %74 = vmatpush1.bf16.msra.mxu0 0
  %75 = vmatprep.subr.bf16.mxu0 0
  %76 = vmatpush1.bf16.msra.mxu0 0
  %77 = vmatprep.subr.bf16.mxu0 0
  %78 = vmatpush1.bf16.msra.mxu0 0
  %79 = vmatprep.mubr.bf16.mxu0 0
  %80 = vmatmul.mubr.bf16.gmra.mrb[0].mxu0 %v45
  %v81 = vpop.f32.mrb[0].mxu0
  %v82 = vadd.f32 0.0, %v81
  %v83 = vpop.f32.mrb[0].mxu0
  %v84 = vpop.f32.mrb[0].mxu0
  %v85 = vadd.f32 0.0, %v84
  %v86 = vpop.f32.mrb[0].mxu0
  %87 = vdwg.mxu0
  %v88 = vadd.f32 %v22, %v82
  %v89 = vadd.f32 %v23, %v85
  %vm90 = vcmask 785408
  %91 = vst.msk [vmem:[#allocation2] sm:$0xff] %vm90, %v88
  %92 = vst.msk [vmem:[#allocation2 + $0x8] sm:$0xff] %vm90, %v89
  // Predicated region
  $region18: #{transformer_forward.11} parent=0 // pred_check
    %p93 = pneg %p15
  $region19: #{transformer_forward.11} parent=0 // pred_check_branch
    %95 = sbr.rel (%p93) target = $region21
  $region20: #{transformer_forward.11} parent=0 // pred_region
    %v96 = vld [vmem:[#allocation2] sm:$0xff]
    %v97 = vld [vmem:[#allocation2 + $0x8] sm:$0xff]
    %v98 = vld [vmem:[%s2] sm:$0x1]
    %v100 = vlaneseq
    %v101 = vshrl.u32 %v100, 7
    %v102 = vsub.s32 0, %v101
    %v103 = vrot.slane %v98, %v102
    %v105 = vadd.f32 %v96, %v103
    %v106 = vadd.f32 %v97, %v103
    %107 = vst.msk [vmem:[%s3] sm:$0xff] %vm90, %v105
    %108 = vst.msk [vmem:[%s3 + $0x8] sm:$0xff] %vm90, %v106
  $region21: #{transformer_forward.11} parent=0 // pred_fallthru
    _
  // Predicated region
  $region22: #{transformer_forward.11} parent=0 // pred_check
    _
  $region23: #{transformer_forward.11} parent=0 // pred_check_branch
    %110 = sbr.rel (0) target = $region25
  $region24: #{transformer_forward.11} parent=0 // pred_region
    _
  $region25: #{transformer_forward.11} parent=0 // pred_fallthru
    _
  // Predicated region
  $region26: #{transformer_forward.11} parent=0 // pred_check
    _
  $region27: #{transformer_forward.11} parent=0 // pred_check_branch
    %112 = sbr.rel (0) target = $region29
  $region28: #{transformer_forward.11} parent=0 // pred_region
    _
  $region29: #{transformer_forward.11} parent=0 // pred_fallthru
    _

// kernel: transformer_forward.10
$region0: #{transformer_forward.10}
  #allocation0 [shape = 'u32[]', space=smem, size = 0x4, offset = 0x4, fixed_abs, tag = 'smem constant byte address 0x4 - core index']
  #allocation1 [shape = 'u32[144,128]{1,0:T(1,128)}', space=vmem, size = 0x12000, scoped, tag = 'internal scratch']
  #allocation2 [shape = 'f32[16,32]{1,0:T(8,128)}', space=vmem, size = 0x2000, scoped, tag = 'scratch operand']
  %s0 = inlined_call_operand.vmem [shape: f32[16,8], index: 0, kind: input, shape index: {}]
  %s1 = inlined_call_operand.vmem [shape: bf16[8,32], index: 1, kind: input, shape index: {}]
  %s2 = inlined_call_operand.vmem [shape: f32[1,32], index: 2, kind: input, shape index: {}]
  %s3 = inlined_call_operand.vmem [shape: f32[16,32], index: 3, kind: output, shape index: {}]
  %s4 = sld [smem:[#allocation0]]
  $region30: #{transformer_forward.10} parent=0
    _
  %s6 = ssub.s32 1, %s4
  %s7 = scalar_select 0, %s6, %s4
  // Predicated region
  $region2: #{transformer_forward.10} parent=0 // pred_check
    _
  $region3: #{transformer_forward.10} parent=0 // pred_check_branch
    %9 = sbr.rel (0) target = $region5
  $region4: #{transformer_forward.10} parent=0 // pred_region
    _
  $region5: #{transformer_forward.10} parent=0 // pred_fallthru
    _
  // Predicated region
  $region6: #{transformer_forward.10} parent=0 // pred_check
    _
  $region7: #{transformer_forward.10} parent=0 // pred_check_branch
    %11 = sbr.rel (0) target = $region9
  $region8: #{transformer_forward.10} parent=0 // pred_region
    _
  $region9: #{transformer_forward.10} parent=0 // pred_fallthru
    _
  // Predicated region
  $region10: #{transformer_forward.10} parent=0 // pred_check
    _
  $region11: #{transformer_forward.10} parent=0 // pred_check_branch
    %13 = sbr.rel (0) target = $region13
  $region12: #{transformer_forward.10} parent=0 // pred_region
    _
  $region13: #{transformer_forward.10} parent=0 // pred_fallthru
    _
  %p15 = scmp.eq.s32.totalorder 0, 0
  // Predicated region
  $region14: #{transformer_forward.10} parent=0 // pred_check
    %p16 = pneg %p15
  $region15: #{transformer_forward.10} parent=0 // pred_check_branch
    %18 = sbr.rel (%p16) target = $region17
  $region16: #{transformer_forward.10} parent=0 // pred_region
    %vm19 = vcmask 261120
    %20 = vst.msk [vmem:[#allocation2] sm:$0xff] %vm19, 0.0
    %21 = vst.msk [vmem:[#allocation2 + $0x8] sm:$0xff] %vm19, 0.0
  $region17: #{transformer_forward.10} parent=0 // pred_fallthru
    _
  %v22 = vld [vmem:[#allocation2] sm:$0xff]
  %v23 = vld [vmem:[#allocation2 + $0x8] sm:$0xff]
  %v24 = vld [vmem:[%s0] sm:$0xff]
  %v25 = vld [vmem:[%s0 + $0x8] sm:$0xff]
  %v26 = vpack.c.bf16 %v25, %v24
  %v27 = vld [vmem:[%s1] sm:$0xf]
  %vm28 = vcmask 64512
  %v30 = vsel %vm28, %v26, 0
  %vm32 = vcmask 1043456
  %v34 = vsel %vm32, %v27, 0
  %36 = vmatprep.subr.bf16.mxu0 0
  %37 = vmatpush1.bf16.msra.mxu0 %v34
  %38 = vmatprep.subr.bf16.mxu0 0
  %39 = vmatpush1.bf16.msra.mxu0 0
  %40 = vmatprep.subr.bf16.mxu0 0
  %41 = vmatpush1.bf16.msra.mxu0 0
  %42 = vmatprep.subr.bf16.mxu0 0
  %43 = vmatpush1.bf16.msra.mxu0 0
  %44 = vmatprep.subr.bf16.mxu0 0
  %45 = vmatpush1.bf16.msra.mxu0 0
  %46 = vmatprep.subr.bf16.mxu0 0
  %47 = vmatpush1.bf16.msra.mxu0 0
  %48 = vmatprep.subr.bf16.mxu0 0
  %49 = vmatpush1.bf16.msra.mxu0 0
  %50 = vmatprep.subr.bf16.mxu0 0
  %51 = vmatpush1.bf16.msra.mxu0 0
  %52 = vmatprep.subr.bf16.mxu0 0
  %53 = vmatpush1.bf16.msra.mxu0 0
  %54 = vmatprep.subr.bf16.mxu0 0
  %55 = vmatpush1.bf16.msra.mxu0 0
  %56 = vmatprep.subr.bf16.mxu0 0
  %57 = vmatpush1.bf16.msra.mxu0 0
  %58 = vmatprep.subr.bf16.mxu0 0
  %59 = vmatpush1.bf16.msra.mxu0 0
  %60 = vmatprep.subr.bf16.mxu0 0
  %61 = vmatpush1.bf16.msra.mxu0 0
  %62 = vmatprep.subr.bf16.mxu0 0
  %63 = vmatpush1.bf16.msra.mxu0 0
  %64 = vmatprep.subr.bf16.mxu0 0
  %65 = vmatpush1.bf16.msra.mxu0 0
  %66 = vmatprep.subr.bf16.mxu0 0
  %67 = vmatpush1.bf16.msra.mxu0 0
  %68 = vmatprep.mubr.bf16.mxu0 0
  %69 = vmatmul.mubr.bf16.gmra.mrb[0].mxu0 %v30
  %v70 = vpop.f32.mrb[0].mxu0
  %v71 = vadd.f32 0.0, %v70
  %v72 = vpop.f32.mrb[0].mxu0
  %v73 = vpop.f32.mrb[0].mxu0
  %v74 = vadd.f32 0.0, %v73
  %v75 = vpop.f32.mrb[0].mxu0
  %76 = vdwg.mxu0
  %v77 = vadd.f32 %v22, %v71
  %v78 = vadd.f32 %v23, %v74
  %vm79 = vcmask 261120
  %80 = vst.msk [vmem:[#allocation2] sm:$0xff] %vm79, %v77
  %81 = vst.msk [vmem:[#allocation2 + $0x8] sm:$0xff] %vm79, %v78
  // Predicated region
  $region18: #{transformer_forward.10} parent=0 // pred_check
    %p82 = pneg %p15
  $region19: #{transformer_forward.10} parent=0 // pred_check_branch
    %84 = sbr.rel (%p82) target = $region21
  $region20: #{transformer_forward.10} parent=0 // pred_region
    %v85 = vld [vmem:[#allocation2] sm:$0xff]
    %v86 = vld [vmem:[#allocation2 + $0x8] sm:$0xff]
    %v87 = vld [vmem:[%s2] sm:$0x1]
    %v89 = vlaneseq
    %v90 = vshrl.u32 %v89, 7
    %v91 = vsub.s32 0, %v90
    %v92 = vrot.slane %v87, %v91
    %v94 = vadd.f32 %v85, %v92
    %v95 = vadd.f32 %v86, %v92
    %96 = vst.msk [vmem:[%s3] sm:$0xff] %vm79, %v94
    %97 = vst.msk [vmem:[%s3 + $0x8] sm:$0xff] %vm79, %v95
  $region21: #{transformer_forward.10} parent=0 // pred_fallthru
    _
  // Predicated region
  $region22: #{transformer_forward.10} parent=0 // pred_check
    _
  $region23: #{transformer_forward.10} parent=0 // pred_check_branch
    %99 = sbr.rel (0) target = $region25
  $region24: #{transformer_forward.10} parent=0 // pred_region
    _
  $region25: #{transformer_forward.10} parent=0 // pred_fallthru
    _
  // Predicated region
  $region26: #{transformer_forward.10} parent=0 // pred_check
    _
  $region27: #{transformer_forward.10} parent=0 // pred_check_branch
    %101 = sbr.rel (0) target = $region29
  $region28: #{transformer_forward.10} parent=0 // pred_region
    _
  $region29: #{transformer_forward.10} parent=0 // pred_fallthru
    _

// kernel: transformer_forward.13
$region0: #{transformer_forward.13}
  #allocation0 [shape = 'u32[]', space=smem, size = 0x4, offset = 0x4, fixed_abs, tag = 'smem constant byte address 0x4 - core index']
  #allocation1 [shape = 'u32[144,128]{1,0:T(1,128)}', space=vmem, size = 0x12000, scoped, tag = 'internal scratch']
  #allocation2 [shape = 'f32[16,32]{1,0:T(8,128)}', space=vmem, size = 0x2000, scoped, tag = 'scratch operand']
  %s0 = inlined_call_operand.vmem [shape: f32[16,32], index: 0, kind: input, shape index: {}]
  %s1 = inlined_call_operand.vmem [shape: bf16[32,32], index: 1, kind: input, shape index: {}]
  %s2 = inlined_call_operand.vmem [shape: f32[1,32], index: 2, kind: input, shape index: {}]
  %s3 = inlined_call_operand.vmem [shape: f32[16,32], index: 3, kind: input, shape index: {}]
  %s4 = inlined_call_operand.vmem [shape: f32[16,32], index: 4, kind: output, shape index: {}]
  %s5 = sld [smem:[#allocation0]]
  $region34: #{transformer_forward.13} parent=0
    _
  %s7 = ssub.s32 1, %s5
  %s8 = scalar_select 0, %s7, %s5
  // Predicated region
  $region2: #{transformer_forward.13} parent=0 // pred_check
    _
  $region3: #{transformer_forward.13} parent=0 // pred_check_branch
    %10 = sbr.rel (0) target = $region5
  $region4: #{transformer_forward.13} parent=0 // pred_region
    _
  $region5: #{transformer_forward.13} parent=0 // pred_fallthru
    _
  // Predicated region
  $region6: #{transformer_forward.13} parent=0 // pred_check
    _
  $region7: #{transformer_forward.13} parent=0 // pred_check_branch
    %12 = sbr.rel (0) target = $region9
  $region8: #{transformer_forward.13} parent=0 // pred_region
    _
  $region9: #{transformer_forward.13} parent=0 // pred_fallthru
    _
  // Predicated region
  $region10: #{transformer_forward.13} parent=0 // pred_check
    _
  $region11: #{transformer_forward.13} parent=0 // pred_check_branch
    %14 = sbr.rel (0) target = $region13
  $region12: #{transformer_forward.13} parent=0 // pred_region
    _
  $region13: #{transformer_forward.13} parent=0 // pred_fallthru
    _
  // Predicated region
  $region14: #{transformer_forward.13} parent=0 // pred_check
    _
  $region15: #{transformer_forward.13} parent=0 // pred_check_branch
    %16 = sbr.rel (0) target = $region17
  $region16: #{transformer_forward.13} parent=0 // pred_region
    _
  $region17: #{transformer_forward.13} parent=0 // pred_fallthru
    _
  %p18 = scmp.eq.s32.totalorder 0, 0
  // Predicated region
  $region18: #{transformer_forward.13} parent=0 // pred_check
    %p19 = pneg %p18
  $region19: #{transformer_forward.13} parent=0 // pred_check_branch
    %21 = sbr.rel (%p19) target = $region21
  $region20: #{transformer_forward.13} parent=0 // pred_region
    %vm22 = vcmask 261120
    %23 = vst.msk [vmem:[#allocation2] sm:$0xff] %vm22, 0.0
    %24 = vst.msk [vmem:[#allocation2 + $0x8] sm:$0xff] %vm22, 0.0
  $region21: #{transformer_forward.13} parent=0 // pred_fallthru
    _
  %v25 = vld [vmem:[#allocation2] sm:$0xff]
  %v26 = vld [vmem:[#allocation2 + $0x8] sm:$0xff]
  %v27 = vld [vmem:[%s0] sm:$0xff]
  %v28 = vld [vmem:[%s0 + $0x8] sm:$0xff]
  %v29 = vpack.c.bf16 %v28, %v27
  %v30 = vld [vmem:[%s1] sm:$0xf]
  %v31 = vld [vmem:[%s1 + $0x4] sm:$0xf]
  %v32 = vld [vmem:[%s1 + $0x8] sm:$0xf]
  %v33 = vld [vmem:[%s1 + $0xc] sm:$0xf]
  %v38 = vunpack.c.l.b16 %v30
  %v39 = vunpack.c.l.b16 %v31
  %v40 = vunpack.c.l.b16 %v32
  %v41 = vunpack.c.l.b16 %v33
  %v42 = vpack.c.b16 %v39, %v38
  %v43 = vpack.c.b16 %v41, %v40
  %vm46 = vcmask 261120
  %v48 = vsel %vm46, %v29, 0
  %50 = vmatprep.subr.bf16.mxu0 0
  %51 = vmatpush1.bf16.msra.mxu0 %v42
  %52 = vmatprep.subr.bf16.mxu0 0
  %53 = vmatpush1.bf16.msra.mxu0 %v43
  %54 = vmatprep.subr.bf16.mxu0 0
  %55 = vmatpush1.bf16.msra.mxu0 0
  %56 = vmatprep.subr.bf16.mxu0 0
  %57 = vmatpush1.bf16.msra.mxu0 0
  %58 = vmatprep.subr.bf16.mxu0 0
  %59 = vmatpush1.bf16.msra.mxu0 0
  %60 = vmatprep.subr.bf16.mxu0 0
  %61 = vmatpush1.bf16.msra.mxu0 0
  %62 = vmatprep.subr.bf16.mxu0 0
  %63 = vmatpush1.bf16.msra.mxu0 0
  %64 = vmatprep.subr.bf16.mxu0 0
  %65 = vmatpush1.bf16.msra.mxu0 0
  %66 = vmatprep.subr.bf16.mxu0 0
  %67 = vmatpush1.bf16.msra.mxu0 0
  %68 = vmatprep.subr.bf16.mxu0 0
  %69 = vmatpush1.bf16.msra.mxu0 0
  %70 = vmatprep.subr.bf16.mxu0 0
  %71 = vmatpush1.bf16.msra.mxu0 0
  %72 = vmatprep.subr.bf16.mxu0 0
  %73 = vmatpush1.bf16.msra.mxu0 0
  %74 = vmatprep.subr.bf16.mxu0 0
  %75 = vmatpush1.bf16.msra.mxu0 0
  %76 = vmatprep.subr.bf16.mxu0 0
  %77 = vmatpush1.bf16.msra.mxu0 0
  %78 = vmatprep.subr.bf16.mxu0 0
  %79 = vmatpush1.bf16.msra.mxu0 0
  %80 = vmatprep.subr.bf16.mxu0 0
  %81 = vmatpush1.bf16.msra.mxu0 0
  %82 = vmatprep.mubr.bf16.mxu0 0
  %83 = vmatmul.mubr.bf16.gmra.mrb[0].mxu0 %v48
  %v84 = vpop.f32.mrb[0].mxu0
  %v85 = vadd.f32 0.0, %v84
  %v86 = vpop.f32.mrb[0].mxu0
  %v87 = vpop.f32.mrb[0].mxu0
  %v88 = vadd.f32 0.0, %v87
  %v89 = vpop.f32.mrb[0].mxu0
  %90 = vdwg.mxu0
  %v91 = vadd.f32 %v25, %v85
  %v92 = vadd.f32 %v26, %v88
  %93 = vst.msk [vmem:[#allocation2] sm:$0xff] %vm46, %v91
  %94 = vst.msk [vmem:[#allocation2 + $0x8] sm:$0xff] %vm46, %v92
  // Predicated region
  $region22: #{transformer_forward.13} parent=0 // pred_check
    %p95 = pneg %p18
  $region23: #{transformer_forward.13} parent=0 // pred_check_branch
    %97 = sbr.rel (%p95) target = $region25
  $region24: #{transformer_forward.13} parent=0 // pred_region
    %v98 = vld [vmem:[#allocation2] sm:$0xff]
    %v99 = vld [vmem:[#allocation2 + $0x8] sm:$0xff]
    %v100 = vld [vmem:[%s2] sm:$0x1]
    %v102 = vlaneseq
    %v103 = vshrl.u32 %v102, 7
    %v104 = vsub.s32 0, %v103
    %v105 = vrot.slane %v100, %v104
    %v107 = vadd.f32 %v98, %v105
    %v108 = vadd.f32 %v99, %v105
    %v109 = vld [vmem:[%s3] sm:$0xff]
    %v110 = vld [vmem:[%s3 + $0x8] sm:$0xff]
    %v111 = vadd.f32 %v107, %v109
    %v112 = vadd.f32 %v108, %v110
    %113 = vst.msk [vmem:[%s4] sm:$0xff] %vm46, %v111
    %114 = vst.msk [vmem:[%s4 + $0x8] sm:$0xff] %vm46, %v112
  $region25: #{transformer_forward.13} parent=0 // pred_fallthru
    _
  // Predicated region
  $region26: #{transformer_forward.13} parent=0 // pred_check
    _
  $region27: #{transformer_forward.13} parent=0 // pred_check_branch
    %116 = sbr.rel (0) target = $region29
  $region28: #{transformer_forward.13} parent=0 // pred_region
    _
  $region29: #{transformer_forward.13} parent=0 // pred_fallthru
    _
  // Predicated region
  $region30: #{transformer_forward.13} parent=0 // pred_check
    _
  $region31: #{transformer_forward.13} parent=0 // pred_check_branch
    %118 = sbr.rel (0) target = $region33
  $region32: #{transformer_forward.13} parent=0 // pred_region
    _
  $region33: #{transformer_forward.13} parent=0 // pred_fallthru
    _

// kernel: transformer_forward.19
$region0: #{transformer_forward.19}
  #allocation0 [shape = 'u32[]', space=smem, size = 0x4, offset = 0x4, fixed_abs, tag = 'smem constant byte address 0x4 - core index']
  #allocation1 [shape = 'u32[144,128]{1,0:T(1,128)}', space=vmem, size = 0x12000, scoped, tag = 'internal scratch']
  #allocation2 [shape = 'f32[16,8]{1,0:T(8,128)}', space=vmem, size = 0x2000, scoped, tag = 'scratch operand']
  %s0 = inlined_call_operand.vmem [shape: f32[16,32], index: 0, kind: input, shape index: {}]
  %s1 = inlined_call_operand.vmem [shape: bf16[32,8], index: 1, kind: input, shape index: {}]
  %s2 = inlined_call_operand.vmem [shape: f32[1,8], index: 2, kind: input, shape index: {}]
  %s3 = inlined_call_operand.hbm [shape: f32[16,8], index: 3, kind: output, shape index: {}]
  %s4 = sld [smem:[#allocation0]]
  $region30: #{transformer_forward.19} parent=0
    _
  %s6 = ssub.s32 1, %s4
  %s7 = scalar_select 0, %s6, %s4
  $region1: #{transformer_forward.19} parent=0
    #allocation3 [shape = 'u8[8192]{0}', space=vmem, size = 0x2000, scoped, tag = 'output window, operand 0, single buffered']
    #allocation4 [shape = 's32[1]{0}', space=sflag, size = 0x4, scoped, tag = 'scoped memory for transformer_forward.19']
    %8 = vsyncpa [#allocation4], 0
    // Predicated region
    $region2: #{transformer_forward.19} parent=1 // pred_check
      _
    $region3: #{transformer_forward.19} parent=1 // pred_check_branch
      %10 = sbr.rel (0) target = $region5
    $region4: #{transformer_forward.19} parent=1 // pred_region
      _
    $region5: #{transformer_forward.19} parent=1 // pred_fallthru
      _
    // Predicated region
    $region6: #{transformer_forward.19} parent=1 // pred_check
      _
    $region7: #{transformer_forward.19} parent=1 // pred_check_branch
      %12 = sbr.rel (0) target = $region9
    $region8: #{transformer_forward.19} parent=1 // pred_region
      _
    $region9: #{transformer_forward.19} parent=1 // pred_fallthru
      _
    // Predicated region
    $region10: #{transformer_forward.19} parent=1 // pred_check
      _
    $region11: #{transformer_forward.19} parent=1 // pred_check_branch
      %14 = sbr.rel (0) target = $region13
    $region12: #{transformer_forward.19} parent=1 // pred_region
      _
    $region13: #{transformer_forward.19} parent=1 // pred_fallthru
      _
    %p16 = scmp.eq.s32.totalorder 0, 0
    // Predicated region
    $region14: #{transformer_forward.19} parent=1 // pred_check
      %p17 = pneg %p16
    $region15: #{transformer_forward.19} parent=1 // pred_check_branch
      %19 = sbr.rel (%p17) target = $region17
    $region16: #{transformer_forward.19} parent=1 // pred_region
      %vm20 = vcmask 64512
      %21 = vst.msk [vmem:[#allocation2] sm:$0xff] %vm20, 0.0
      %22 = vst.msk [vmem:[#allocation2 + $0x8] sm:$0xff] %vm20, 0.0
    $region17: #{transformer_forward.19} parent=1 // pred_fallthru
      _
    %v23 = vld [vmem:[#allocation2] sm:$0xff]
    %v24 = vld [vmem:[#allocation2 + $0x8] sm:$0xff]
    %v25 = vld [vmem:[%s0] sm:$0xff]
    %v26 = vld [vmem:[%s0 + $0x8] sm:$0xff]
    %v27 = vpack.c.bf16 %v26, %v25
    %v28 = vld [vmem:[%s1] sm:$0xf]
    %v29 = vld [vmem:[%s1 + $0x4] sm:$0xf]
    %v30 = vld [vmem:[%s1 + $0x8] sm:$0xf]
    %v31 = vld [vmem:[%s1 + $0xc] sm:$0xf]
    %v36 = vunpack.c.l.b16 %v28
    %v37 = vunpack.c.l.b16 %v29
    %v38 = vunpack.c.l.b16 %v30
    %v39 = vunpack.c.l.b16 %v31
    %v40 = vpack.c.b16 %v37, %v36
    %v41 = vpack.c.b16 %v39, %v38
    %vm44 = vcmask 261120
    %v46 = vsel %vm44, %v27, 0
    %48 = vmatprep.subr.bf16.mxu0 0
    %49 = vmatpush1.bf16.msra.mxu0 %v40
    %50 = vmatprep.subr.bf16.mxu0 0
    %51 = vmatpush1.bf16.msra.mxu0 %v41
    %52 = vmatprep.subr.bf16.mxu0 0
    %53 = vmatpush1.bf16.msra.mxu0 0
    %54 = vmatprep.subr.bf16.mxu0 0
    %55 = vmatpush1.bf16.msra.mxu0 0
    %56 = vmatprep.subr.bf16.mxu0 0
    %57 = vmatpush1.bf16.msra.mxu0 0
    %58 = vmatprep.subr.bf16.mxu0 0
    %59 = vmatpush1.bf16.msra.mxu0 0
    %60 = vmatprep.subr.bf16.mxu0 0
    %61 = vmatpush1.bf16.msra.mxu0 0
    %62 = vmatprep.subr.bf16.mxu0 0
    %63 = vmatpush1.bf16.msra.mxu0 0
    %64 = vmatprep.subr.bf16.mxu0 0
    %65 = vmatpush1.bf16.msra.mxu0 0
    %66 = vmatprep.subr.bf16.mxu0 0
    %67 = vmatpush1.bf16.msra.mxu0 0
    %68 = vmatprep.subr.bf16.mxu0 0
    %69 = vmatpush1.bf16.msra.mxu0 0
    %70 = vmatprep.subr.bf16.mxu0 0
    %71 = vmatpush1.bf16.msra.mxu0 0
    %72 = vmatprep.subr.bf16.mxu0 0
    %73 = vmatpush1.bf16.msra.mxu0 0
    %74 = vmatprep.subr.bf16.mxu0 0
    %75 = vmatpush1.bf16.msra.mxu0 0
    %76 = vmatprep.subr.bf16.mxu0 0
    %77 = vmatpush1.bf16.msra.mxu0 0
    %78 = vmatprep.subr.bf16.mxu0 0
    %79 = vmatpush1.bf16.msra.mxu0 0
    %80 = vmatprep.mubr.bf16.mxu0 0
    %81 = vmatmul.mubr.bf16.gmra.mrb[0].mxu0 %v46
    %v82 = vpop.f32.mrb[0].mxu0
    %v83 = vadd.f32 0.0, %v82
    %v84 = vpop.f32.mrb[0].mxu0
    %v85 = vpop.f32.mrb[0].mxu0
    %v86 = vadd.f32 0.0, %v85
    %v87 = vpop.f32.mrb[0].mxu0
    %88 = vdwg.mxu0
    %v89 = vadd.f32 %v23, %v83
    %v90 = vadd.f32 %v24, %v86
    %vm91 = vcmask 64512
    %92 = vst.msk [vmem:[#allocation2] sm:$0xff] %vm91, %v89
    %93 = vst.msk [vmem:[#allocation2 + $0x8] sm:$0xff] %vm91, %v90
    // Predicated region
    $region18: #{transformer_forward.19} parent=1 // pred_check
      %p94 = pneg %p16
    $region19: #{transformer_forward.19} parent=1 // pred_check_branch
      %96 = sbr.rel (%p94) target = $region21
    $region20: #{transformer_forward.19} parent=1 // pred_region
      %v97 = vld [vmem:[#allocation2] sm:$0xff]
      %v98 = vld [vmem:[#allocation2 + $0x8] sm:$0xff]
      %v99 = vld [vmem:[%s2] sm:$0x1]
      %v101 = vlaneseq
      %v102 = vshrl.u32 %v101, 7
      %v103 = vsub.s32 0, %v102
      %v104 = vrot.slane %v99, %v103
      %v106 = vadd.f32 %v97, %v104
      %v107 = vadd.f32 %v98, %v104
      %108 = vst.msk [vmem:[#allocation3] sm:$0xff] %vm91, %v106
      %109 = vst.msk [vmem:[#allocation3 + $0x8] sm:$0xff] %vm91, %v107
    $region21: #{transformer_forward.19} parent=1 // pred_fallthru
      _
    // Predicated region
    $region22: #{transformer_forward.19} parent=1 // pred_check
      _
    $region23: #{transformer_forward.19} parent=1 // pred_check_branch
      %111 = sbr.rel (0) target = $region25
    $region24: #{transformer_forward.19} parent=1 // pred_region
      %s113 = ssub.s32 256, 256
      %114 = vsyncadd [#allocation4], %s113
      %s115 = sshll.u32 [#allocation3], 4
      %s116 = int_to_ptr.vmem [resolvable:$true] %s115
      %121 = dma.vmem_to_hbm [thread:$0]  %s116, 256, %s3, [#allocation4], 128, 128, 8
    $region25: #{transformer_forward.19} parent=1 // pred_fallthru
      _
    // Predicated region
    $region26: #{transformer_forward.19} parent=1 // pred_check
      _
    $region27: #{transformer_forward.19} parent=1 // pred_check_branch
      %123 = sbr.rel (0) target = $region29
    $region28: #{transformer_forward.19} parent=1 // pred_region
      %124 = dma.done [#allocation4], 256
    $region29: #{transformer_forward.19} parent=1 // pred_fallthru
      _
    %125 = vsyncpa [#allocation4], 1

// kernel: transformer_forward.14
$region0: #{transformer_forward.14}
  #allocation0 [shape = 'u32[]', space=smem, size = 0x4, offset = 0x4, fixed_abs, tag = 'smem constant byte address 0x4 - core index']
  #allocation1 [shape = 'u32[144,128]{1,0:T(1,128)}', space=vmem, size = 0x12000, scoped, tag = 'internal scratch']
  #allocation2 [shape = 'f32[16,32]{1,0:T(8,128)}', space=vmem, size = 0x2000, scoped, tag = 'scratch operand']
  %s0 = inlined_call_operand.vmem [shape: f32[16,32], index: 0, kind: input, shape index: {}]
  %s1 = inlined_call_operand.vmem [shape: bf16[32,128], index: 1, kind: input, shape index: {}]
  %s2 = inlined_call_operand.vmem [shape: f32[1,128], index: 2, kind: input, shape index: {}]
  %s3 = inlined_call_operand.vmem [shape: bf16[128,32], index: 3, kind: input, shape index: {}]
  %s4 = inlined_call_operand.vmem [shape: f32[1,32], index: 4, kind: input, shape index: {}]
  %s5 = inlined_call_operand.vmem [shape: f32[16,32], index: 5, kind: output, shape index: {}]
  %s6 = sld [smem:[#allocation0]]
  $region38: #{transformer_forward.14} parent=0
    _
  %s8 = ssub.s32 1, %s6
  %s9 = scalar_select 0, %s8, %s6
  // Predicated region
  $region2: #{transformer_forward.14} parent=0 // pred_check
    _
  $region3: #{transformer_forward.14} parent=0 // pred_check_branch
    %11 = sbr.rel (0) target = $region5
  $region4: #{transformer_forward.14} parent=0 // pred_region
    _
  $region5: #{transformer_forward.14} parent=0 // pred_fallthru
    _
  // Predicated region
  $region6: #{transformer_forward.14} parent=0 // pred_check
    _
  $region7: #{transformer_forward.14} parent=0 // pred_check_branch
    %13 = sbr.rel (0) target = $region9
  $region8: #{transformer_forward.14} parent=0 // pred_region
    _
  $region9: #{transformer_forward.14} parent=0 // pred_fallthru
    _
  // Predicated region
  $region10: #{transformer_forward.14} parent=0 // pred_check
    _
  $region11: #{transformer_forward.14} parent=0 // pred_check_branch
    %15 = sbr.rel (0) target = $region13
  $region12: #{transformer_forward.14} parent=0 // pred_region
    _
  $region13: #{transformer_forward.14} parent=0 // pred_fallthru
    _
  // Predicated region
  $region14: #{transformer_forward.14} parent=0 // pred_check
    _
  $region15: #{transformer_forward.14} parent=0 // pred_check_branch
    %17 = sbr.rel (0) target = $region17
  $region16: #{transformer_forward.14} parent=0 // pred_region
    _
  $region17: #{transformer_forward.14} parent=0 // pred_fallthru
    _
  // Predicated region
  $region18: #{transformer_forward.14} parent=0 // pred_check
    _
  $region19: #{transformer_forward.14} parent=0 // pred_check_branch
    %19 = sbr.rel (0) target = $region21
  $region20: #{transformer_forward.14} parent=0 // pred_region
    _
  $region21: #{transformer_forward.14} parent=0 // pred_fallthru
    _
  %p21 = scmp.eq.s32.totalorder 0, 0
  // Predicated region
  $region22: #{transformer_forward.14} parent=0 // pred_check
    %p22 = pneg %p21
  $region23: #{transformer_forward.14} parent=0 // pred_check_branch
    %24 = sbr.rel (%p22) target = $region25
  $region24: #{transformer_forward.14} parent=0 // pred_region
    %vm25 = vcmask 261120
    %26 = vst.msk [vmem:[#allocation2] sm:$0xff] %vm25, 0.0
    %27 = vst.msk [vmem:[#allocation2 + $0x8] sm:$0xff] %vm25, 0.0
  $region25: #{transformer_forward.14} parent=0 // pred_fallthru
    _
  %v28 = vld [vmem:[%s0] sm:$0xff]
  %v29 = vld [vmem:[%s0 + $0x8] sm:$0xff]
  %v30 = vpack.c.bf16 %v29, %v28
  %v31 = vld [vmem:[%s1] sm:$0xf]
  %v32 = vld [vmem:[%s1 + $0x4] sm:$0xf]
  %v33 = vld [vmem:[%s1 + $0x8] sm:$0xf]
  %v34 = vld [vmem:[%s1 + $0xc] sm:$0xf]
  %v35 = vld [vmem:[%s2] sm:$0x1]
  %v37 = vlaneseq
  %v38 = vshrl.u32 %v37, 7
  %v39 = vsub.s32 0, %v38
  %v40 = vrot.slane %v35, %v39
  %v46 = vunpack.c.l.b16 %v31
  %v47 = vunpack.c.l.b16 %v32
  %v48 = vunpack.c.l.b16 %v33
  %v49 = vunpack.c.l.b16 %v34
  %v50 = vpack.c.b16 %v47, %v46
  %v51 = vpack.c.b16 %v49, %v48
  %vm54 = vcmask 261120
  %v56 = vsel %vm54, %v30, 0
  %58 = vmatprep.subr.bf16.mxu0 0
  %59 = vmatpush1.bf16.msra.mxu0 %v50
  %60 = vmatprep.subr.bf16.mxu0 0
  %61 = vmatpush1.bf16.msra.mxu0 %v51
  %62 = vmatprep.subr.bf16.mxu0 0
  %63 = vmatpush1.bf16.msra.mxu0 0
  %64 = vmatprep.subr.bf16.mxu0 0
  %65 = vmatpush1.bf16.msra.mxu0 0
  %66 = vmatprep.subr.bf16.mxu0 0
  %67 = vmatpush1.bf16.msra.mxu0 0
  %68 = vmatprep.subr.bf16.mxu0 0
  %69 = vmatpush1.bf16.msra.mxu0 0
  %70 = vmatprep.subr.bf16.mxu0 0
  %71 = vmatpush1.bf16.msra.mxu0 0
  %72 = vmatprep.subr.bf16.mxu0 0
  %73 = vmatpush1.bf16.msra.mxu0 0
  %74 = vmatprep.subr.bf16.mxu0 0
  %75 = vmatpush1.bf16.msra.mxu0 0
  %76 = vmatprep.subr.bf16.mxu0 0
  %77 = vmatpush1.bf16.msra.mxu0 0
  %78 = vmatprep.subr.bf16.mxu0 0
  %79 = vmatpush1.bf16.msra.mxu0 0
  %80 = vmatprep.subr.bf16.mxu0 0
  %81 = vmatpush1.bf16.msra.mxu0 0
  %82 = vmatprep.subr.bf16.mxu0 0
  %83 = vmatpush1.bf16.msra.mxu0 0
  %84 = vmatprep.subr.bf16.mxu0 0
  %85 = vmatpush1.bf16.msra.mxu0 0
  %86 = vmatprep.subr.bf16.mxu0 0
  %87 = vmatpush1.bf16.msra.mxu0 0
  %88 = vmatprep.subr.bf16.mxu0 0
  %89 = vmatpush1.bf16.msra.mxu0 0
  %90 = vmatprep.mubr.bf16.mxu0 0
  %91 = vmatmul.mubr.bf16.gmra.mrb[0].mxu0 %v56
  %v92 = vpop.f32.mrb[0].mxu0
  %v93 = vadd.f32 %v40, %v92
  %v94 = vpop.f32.mrb[0].mxu0
  %v95 = vpop.f32.mrb[0].mxu0
  %v96 = vadd.f32 %v40, %v95
  %v97 = vpop.f32.mrb[0].mxu0
  %98 = vdwg.mxu0
  %v99 = vmul.f32 %v93, 0.5
  %v100 = vmul.f32 %v96, 0.5
  %v101 = vmul.f32 %v93, 0.044715
  %v102 = vmul.f32 %v96, 0.044715
  %v103 = vmul.f32 %v101, %v93
  %v104 = vmul.f32 %v102, %v96
  %v105 = vmul.f32 %v103, %v93
  %v106 = vmul.f32 %v104, %v96
  %v107 = vadd.f32 %v93, %v105
  %v108 = vadd.f32 %v96, %v106
  %v109 = vmul.f32 %v107, 0.7978846
  %v110 = vmul.f32 %v108, 0.7978846
  %v111 = vtanh.pop %v109
  %v112 = vtanh.pop %v110
  %v113 = vadd.f32 %v111, 1.0
  %v114 = vadd.f32 %v112, 1.0
  %v115 = vmul.f32 %v99, %v113
  %v116 = vmul.f32 %v100, %v114
  %v117 = vld [vmem:[#allocation2] sm:$0xff]
  %v118 = vld [vmem:[#allocation2 + $0x8] sm:$0xff]
  %v119 = vpack.c.bf16 %v116, %v115
  %v120 = vld [vmem:[%s3] sm:$0xf]
  %v121 = vld [vmem:[%s3 + $0x4] sm:$0xf]
  %v122 = vld [vmem:[%s3 + $0x8] sm:$0xf]
  %v123 = vld [vmem:[%s3 + $0xc] sm:$0xf]
  %v124 = vld [vmem:[%s3 + $0x10] sm:$0xf]
  %v125 = vld [vmem:[%s3 + $0x14] sm:$0xf]
  %v126 = vld [vmem:[%s3 + $0x18] sm:$0xf]
  %v127 = vld [vmem:[%s3 + $0x1c] sm:$0xf]
  %v128 = vld [vmem:[%s3 + $0x20] sm:$0xf]
  %v129 = vld [vmem:[%s3 + $0x24] sm:$0xf]
  %v130 = vld [vmem:[%s3 + $0x28] sm:$0xf]
  %v131 = vld [vmem:[%s3 + $0x2c] sm:$0xf]
  %v132 = vld [vmem:[%s3 + $0x30] sm:$0xf]
  %v133 = vld [vmem:[%s3 + $0x34] sm:$0xf]
  %v134 = vld [vmem:[%s3 + $0x38] sm:$0xf]
  %v135 = vld [vmem:[%s3 + $0x3c] sm:$0xf]
  %v152 = vunpack.c.l.b16 %v120
  %v153 = vunpack.c.l.b16 %v121
  %v154 = vunpack.c.l.b16 %v122
  %v155 = vunpack.c.l.b16 %v123
  %v156 = vunpack.c.l.b16 %v124
  %v157 = vunpack.c.l.b16 %v125
  %v158 = vunpack.c.l.b16 %v126
  %v159 = vunpack.c.l.b16 %v127
  %v160 = vunpack.c.l.b16 %v128
  %v161 = vunpack.c.l.b16 %v129
  %v162 = vunpack.c.l.b16 %v130
  %v163 = vunpack.c.l.b16 %v131
  %v164 = vunpack.c.l.b16 %v132
  %v165 = vunpack.c.l.b16 %v133
  %v166 = vunpack.c.l.b16 %v134
  %v167 = vunpack.c.l.b16 %v135
  %v168 = vpack.c.b16 %v153, %v152
  %v169 = vpack.c.b16 %v155, %v154
  %v170 = vpack.c.b16 %v157, %v156
  %v171 = vpack.c.b16 %v159, %v158
  %v172 = vpack.c.b16 %v161, %v160
  %v173 = vpack.c.b16 %v163, %v162
  %v174 = vpack.c.b16 %v165, %v164
  %v175 = vpack.c.b16 %v167, %v166
  %184 = vmatprep.subr.bf16.mxu0 0
  %185 = vmatpush1.bf16.msra.mxu0 %v168
  %186 = vmatprep.subr.bf16.mxu0 0
  %187 = vmatpush1.bf16.msra.mxu0 %v169
  %188 = vmatprep.subr.bf16.mxu0 0
  %189 = vmatpush1.bf16.msra.mxu0 %v170
  %190 = vmatprep.subr.bf16.mxu0 0
  %191 = vmatpush1.bf16.msra.mxu0 %v171
  %192 = vmatprep.subr.bf16.mxu0 0
  %193 = vmatpush1.bf16.msra.mxu0 %v172
  %194 = vmatprep.subr.bf16.mxu0 0
  %195 = vmatpush1.bf16.msra.mxu0 %v173
  %196 = vmatprep.subr.bf16.mxu0 0
  %197 = vmatpush1.bf16.msra.mxu0 %v174
  %198 = vmatprep.subr.bf16.mxu0 0
  %199 = vmatpush1.bf16.msra.mxu0 %v175
  %200 = vmatprep.subr.bf16.mxu0 0
  %201 = vmatpush1.bf16.msra.mxu0 0
  %202 = vmatprep.subr.bf16.mxu0 0
  %203 = vmatpush1.bf16.msra.mxu0 0
  %204 = vmatprep.subr.bf16.mxu0 0
  %205 = vmatpush1.bf16.msra.mxu0 0
  %206 = vmatprep.subr.bf16.mxu0 0
  %207 = vmatpush1.bf16.msra.mxu0 0
  %208 = vmatprep.subr.bf16.mxu0 0
  %209 = vmatpush1.bf16.msra.mxu0 0
  %210 = vmatprep.subr.bf16.mxu0 0
  %211 = vmatpush1.bf16.msra.mxu0 0
  %212 = vmatprep.subr.bf16.mxu0 0
  %213 = vmatpush1.bf16.msra.mxu0 0
  %214 = vmatprep.subr.bf16.mxu0 0
  %215 = vmatpush1.bf16.msra.mxu0 0
  %216 = vmatprep.mubr.bf16.mxu0 0
  %217 = vmatmul.mubr.bf16.gmra.mrb[0].mxu0 %v119
  %v218 = vpop.f32.mrb[0].mxu0
  %v219 = vadd.f32 0.0, %v218
  %v220 = vpop.f32.mrb[0].mxu0
  %v221 = vpop.f32.mrb[0].mxu0
  %v222 = vadd.f32 0.0, %v221
  %v223 = vpop.f32.mrb[0].mxu0
  %224 = vdwg.mxu0
  %v225 = vadd.f32 %v117, %v219
  %v226 = vadd.f32 %v118, %v222
  %227 = vst.msk [vmem:[#allocation2] sm:$0xff] %vm54, %v225
  %228 = vst.msk [vmem:[#allocation2 + $0x8] sm:$0xff] %vm54, %v226
  // Predicated region
  $region26: #{transformer_forward.14} parent=0 // pred_check
    %p229 = pneg %p21
  $region27: #{transformer_forward.14} parent=0 // pred_check_branch
    %231 = sbr.rel (%p229) target = $region29
  $region28: #{transformer_forward.14} parent=0 // pred_region
    %v232 = vld [vmem:[#allocation2] sm:$0xff]
    %v233 = vld [vmem:[#allocation2 + $0x8] sm:$0xff]
    %v234 = vld [vmem:[%s4] sm:$0x1]
    %v236 = vlaneseq
    %v237 = vshrl.u32 %v236, 7
    %v238 = vsub.s32 0, %v237
    %v239 = vrot.slane %v234, %v238
    %v241 = vadd.f32 %v232, %v239
    %v242 = vadd.f32 %v233, %v239
    %v243 = vld [vmem:[%s0] sm:$0xff]
    %v244 = vld [vmem:[%s0 + $0x8] sm:$0xff]
    %v245 = vadd.f32 %v241, %v243
    %v246 = vadd.f32 %v242, %v244
    %247 = vst.msk [vmem:[%s5] sm:$0xff] %vm54, %v245
    %248 = vst.msk [vmem:[%s5 + $0x8] sm:$0xff] %vm54, %v246
  $region29: #{transformer_forward.14} parent=0 // pred_fallthru
    _
  // Predicated region
  $region30: #{transformer_forward.14} parent=0 // pred_check
    _
  $region31: #{transformer_forward.14} parent=0 // pred_check_branch
    %250 = sbr.rel (0) target = $region33
  $region32: #{transformer_forward.14} parent=0 // pred_region
    _
  $region33: #{transformer_forward.14} parent=0 // pred_fallthru
    _
  // Predicated region
  $region34: #{transformer_forward.14} parent=0 // pred_check
    _
  $region35: #{transformer_forward.14} parent=0 // pred_check_branch
    %252 = sbr.rel (0) target = $region37
  $region36: #{transformer_forward.14} parent=0 // pred_region
    _
  $region37: #{transformer_forward.14} parent=0 // pred_fallthru
    _

// kernel: transformer_forward.12
$region0: #{transformer_forward.12}
  #allocation0 [shape = 'u32[]', space=smem, size = 0x4, offset = 0x4, fixed_abs, tag = 'smem constant byte address 0x4 - core index']
  #allocation1 [shape = 'u32[144,128]{1,0:T(1,128)}', space=vmem, size = 0x12000, scoped, tag = 'internal scratch']
  #allocation2 [shape = 'f32[8,8,1]{2,1,0:T(8,128)}', space=vmem, size = 0x8000, scoped, tag = 'scratch operand']
  #allocation3 [shape = 'f32[8,8,1]{2,1,0:T(8,128)}', space=vmem, size = 0x8000, scoped, tag = 'scratch operand']
  #allocation4 [shape = 'f32[8,8,8]{2,1,0:T(8,128)}', space=vmem, size = 0x8000, scoped, tag = 'scratch operand']
  %s0 = inlined_call_operand.vmem [shape: f32[8,8,8], index: 0, kind: input, shape index: {}]
  %s1 = inlined_call_operand.vmem [shape: f32[8,8,8], index: 1, kind: input, shape index: {}]
  %s2 = inlined_call_operand.vmem [shape: f32[8,8,8], index: 2, kind: input, shape index: {}]
  %s3 = inlined_call_operand.vmem [shape: f32[8,8,8], index: 3, kind: output, shape index: {}]
  %s4 = sld [smem:[#allocation0]]
  $region34: #{transformer_forward.12} parent=0
    _
  %s6 = ssub.s32 1, %s4
  %s7 = scalar_select 0, %s6, %s4
  // Predicated region
  $region2: #{transformer_forward.12} parent=0 // pred_check
    _
  $region3: #{transformer_forward.12} parent=0 // pred_check_branch
    %9 = sbr.rel (0) target = $region5
  $region4: #{transformer_forward.12} parent=0 // pred_region
    _
  $region5: #{transformer_forward.12} parent=0 // pred_fallthru
    _
  // Predicated region
  $region6: #{transformer_forward.12} parent=0 // pred_check
    _
  $region7: #{transformer_forward.12} parent=0 // pred_check_branch
    %11 = sbr.rel (0) target = $region9
  $region8: #{transformer_forward.12} parent=0 // pred_region
    _
  $region9: #{transformer_forward.12} parent=0 // pred_fallthru
    _
  // Predicated region
  $region10: #{transformer_forward.12} parent=0 // pred_check
    _
  $region11: #{transformer_forward.12} parent=0 // pred_check_branch
    %13 = sbr.rel (0) target = $region13
  $region12: #{transformer_forward.12} parent=0 // pred_region
    _
  $region13: #{transformer_forward.12} parent=0 // pred_fallthru
    _
  %p15 = scmp.eq.s32.totalorder 0, 0
  // Predicated region
  $region14: #{transformer_forward.12} parent=0 // pred_check
    %p16 = pneg %p15
  $region15: #{transformer_forward.12} parent=0 // pred_check_branch
    %18 = sbr.rel (%p16) target = $region17
  $region16: #{transformer_forward.12} parent=0 // pred_region
    %vm19 = vcmask 7168
    %20 = vst.msk [vmem:[#allocation2] sm:$0xff] %vm19, -inf
    %21 = vst.msk [vmem:[#allocation2 + $0x8] sm:$0xff] %vm19, -inf
    %22 = vst.msk [vmem:[#allocation2 + $0x10] sm:$0xff] %vm19, -inf
    %23 = vst.msk [vmem:[#allocation2 + $0x18] sm:$0xff] %vm19, -inf
    %24 = vst.msk [vmem:[#allocation2 + $0x20] sm:$0xff] %vm19, -inf
    %25 = vst.msk [vmem:[#allocation2 + $0x28] sm:$0xff] %vm19, -inf
    %26 = vst.msk [vmem:[#allocation2 + $0x30] sm:$0xff] %vm19, -inf
    %27 = vst.msk [vmem:[#allocation2 + $0x38] sm:$0xff] %vm19, -inf
    %28 = vst.msk [vmem:[#allocation3] sm:$0xff] %vm19, 0.0
    %29 = vst.msk [vmem:[#allocation3 + $0x8] sm:$0xff] %vm19, 0.0
    %30 = vst.msk [vmem:[#allocation3 + $0x10] sm:$0xff] %vm19, 0.0
    %31 = vst.msk [vmem:[#allocation3 + $0x18] sm:$0xff] %vm19, 0.0
    %32 = vst.msk [vmem:[#allocation3 + $0x20] sm:$0xff] %vm19, 0.0
    %33 = vst.msk [vmem:[#allocation3 + $0x28] sm:$0xff] %vm19, 0.0
    %34 = vst.msk [vmem:[#allocation3 + $0x30] sm:$0xff] %vm19, 0.0
    %35 = vst.msk [vmem:[#allocation3 + $0x38] sm:$0xff] %vm19, 0.0
    %vm36 = vcmask 64512
    %37 = vst.msk [vmem:[#allocation4] sm:$0xff] %vm36, 0.0
    %38 = vst.msk [vmem:[#allocation4 + $0x8] sm:$0xff] %vm36, 0.0
    %39 = vst.msk [vmem:[#allocation4 + $0x10] sm:$0xff] %vm36, 0.0
    %40 = vst.msk [vmem:[#allocation4 + $0x18] sm:$0xff] %vm36, 0.0
    %41 = vst.msk [vmem:[#allocation4 + $0x20] sm:$0xff] %vm36, 0.0
    %42 = vst.msk [vmem:[#allocation4 + $0x28] sm:$0xff] %vm36, 0.0
    %43 = vst.msk [vmem:[#allocation4 + $0x30] sm:$0xff] %vm36, 0.0
    %44 = vst.msk [vmem:[#allocation4 + $0x38] sm:$0xff] %vm36, 0.0
  $region17: #{transformer_forward.12} parent=0 // pred_fallthru
    _
  %s45 = smul.u32 0, 8
  %s46 = smul.u32 0, 8
  %s47 = sadd.s32 %s45, 7
  %p48 = scmp.le.s32.totalorder %s46, %s47
  // Predicated region
  $region18: #{transformer_forward.12} parent=0 // pred_check
    %p49 = pneg %p48
  $region19: #{transformer_forward.12} parent=0 // pred_check_branch
    %51 = sbr.rel (%p49) target = $region21
  $region20: #{transformer_forward.12} parent=0 // pred_region
    %v52 = vld [vmem:[%s0] sm:$0xff]
    %v53 = vld [vmem:[%s0 + $0x8] sm:$0xff]
    %v54 = vld [vmem:[%s0 + $0x10] sm:$0xff]
    %v55 = vld [vmem:[%s0 + $0x18] sm:$0xff]
    %v56 = vld [vmem:[%s0 + $0x20] sm:$0xff]
    %v57 = vld [vmem:[%s0 + $0x28] sm:$0xff]
    %v58 = vld [vmem:[%s0 + $0x30] sm:$0xff]
    %v59 = vld [vmem:[%s0 + $0x38] sm:$0xff]
    %v60 = vpack.c.bf16 %v52, %v52
    %v61 = vpack.c.bf16 %v53, %v53
    %v62 = vpack.c.bf16 %v54, %v54
    %v63 = vpack.c.bf16 %v55, %v55
    %v64 = vpack.c.bf16 %v56, %v56
    %v65 = vpack.c.bf16 %v57, %v57
    %v66 = vpack.c.bf16 %v58, %v58
    %v67 = vpack.c.bf16 %v59, %v59
    %v68 = vld [vmem:[%s1] sm:$0xff]
    %v69 = vld [vmem:[%s1 + $0x8] sm:$0xff]
    %v70 = vld [vmem:[%s1 + $0x10] sm:$0xff]
    %v71 = vld [vmem:[%s1 + $0x18] sm:$0xff]
    %v72 = vld [vmem:[%s1 + $0x20] sm:$0xff]
    %v73 = vld [vmem:[%s1 + $0x28] sm:$0xff]
    %v74 = vld [vmem:[%s1 + $0x30] sm:$0xff]
    %v75 = vld [vmem:[%s1 + $0x38] sm:$0xff]
    %v76 = vpack.c.bf16 %v68, %v68
    %v77 = vpack.c.bf16 %v69, %v69
    %v78 = vpack.c.bf16 %v70, %v70
    %v79 = vpack.c.bf16 %v71, %v71
    %v80 = vpack.c.bf16 %v72, %v72
    %v81 = vpack.c.bf16 %v73, %v73
    %v82 = vpack.c.bf16 %v74, %v74
    %v83 = vpack.c.bf16 %v75, %v75
    %vm84 = vcmask 64512
    %v86 = vsel %vm84, %v60, 0
    %v89 = vsel %vm84, %v76, 0
    %91 = vmatprep.subr.bf16.mxu0 0
    %92 = vmatpush1.bf16.xpose.msra.mxu0 %v89
    %93 = vmatprep.subr.bf16.mxu0 0
    %94 = vmatpush1.bf16.xpose.msra.mxu0 0
    %95 = vmatprep.subr.bf16.mxu0 0
    %96 = vmatpush1.bf16.xpose.msra.mxu0 0
    %97 = vmatprep.subr.bf16.mxu0 0
    %98 = vmatpush1.bf16.xpose.msra.mxu0 0
    %99 = vmatprep.subr.bf16.mxu0 0
    %100 = vmatpush1.bf16.xpose.msra.mxu0 0
    %101 = vmatprep.subr.bf16.mxu0 0
    %102 = vmatpush1.bf16.xpose.msra.mxu0 0
    %103 = vmatprep.subr.bf16.mxu0 0
    %104 = vmatpush1.bf16.xpose.msra.mxu0 0
    %105 = vmatprep.subr.bf16.mxu0 0
    %106 = vmatpush1.bf16.xpose.msra.mxu0 0
    %107 = vmatprep.subr.bf16.mxu0 0
    %108 = vmatpush1.bf16.xpose.msra.mxu0 0
    %109 = vmatprep.subr.bf16.mxu0 0
    %110 = vmatpush1.bf16.xpose.msra.mxu0 0
    %111 = vmatprep.subr.bf16.mxu0 0
    %112 = vmatpush1.bf16.xpose.msra.mxu0 0
    %113 = vmatprep.subr.bf16.mxu0 0
    %114 = vmatpush1.bf16.xpose.msra.mxu0 0
    %115 = vmatprep.subr.bf16.mxu0 0
    %116 = vmatpush1.bf16.xpose.msra.mxu0 0
    %117 = vmatprep.subr.bf16.mxu0 0
    %118 = vmatpush1.bf16.xpose.msra.mxu0 0
    %119 = vmatprep.subr.bf16.mxu0 0
    %120 = vmatpush1.bf16.xpose.msra.mxu0 0
    %121 = vmatprep.subr.bf16.mxu0 0
    %122 = vmatpush1.bf16.xpose.msra.mxu0 0
    %123 = vmatprep.mubr.bf16.mxu0 0
    %124 = vmatmul.mubr.bf16.gmra.mrb[0].mxu0 %v86
    %v125 = vpop.f32.mrb[0].mxu0
    %v126 = vadd.f32 0.0, %v125
    %v127 = vpop.f32.mrb[0].mxu0
    %v128 = vpop.f32.mrb[0].mxu0
    %v129 = vpop.f32.mrb[0].mxu0
    %130 = vdwg.mxu0
    %v132 = vsel %vm84, %v61, 0
    %v135 = vsel %vm84, %v77, 0
    %137 = vmatprep.subr.bf16.mxu0 0
    %138 = vmatpush1.bf16.xpose.msra.mxu0 %v135
    %139 = vmatprep.subr.bf16.mxu0 0
    %140 = vmatpush1.bf16.xpose.msra.mxu0 0
    %141 = vmatprep.subr.bf16.mxu0 0
    %142 = vmatpush1.bf16.xpose.msra.mxu0 0
    %143 = vmatprep.subr.bf16.mxu0 0
    %144 = vmatpush1.bf16.xpose.msra.mxu0 0
    %145 = vmatprep.subr.bf16.mxu0 0
    %146 = vmatpush1.bf16.xpose.msra.mxu0 0
    %147 = vmatprep.subr.bf16.mxu0 0
    %148 = vmatpush1.bf16.xpose.msra.mxu0 0
    %149 = vmatprep.subr.bf16.mxu0 0
    %150 = vmatpush1.bf16.xpose.msra.mxu0 0
    %151 = vmatprep.subr.bf16.mxu0 0
    %152 = vmatpush1.bf16.xpose.msra.mxu0 0
    %153 = vmatprep.subr.bf16.mxu0 0
    %154 = vmatpush1.bf16.xpose.msra.mxu0 0
    %155 = vmatprep.subr.bf16.mxu0 0
    %156 = vmatpush1.bf16.xpose.msra.mxu0 0
    %157 = vmatprep.subr.bf16.mxu0 0
    %158 = vmatpush1.bf16.xpose.msra.mxu0 0
    %159 = vmatprep.subr.bf16.mxu0 0
    %160 = vmatpush1.bf16.xpose.msra.mxu0 0
    %161 = vmatprep.subr.bf16.mxu0 0
    %162 = vmatpush1.bf16.xpose.msra.mxu0 0
    %163 = vmatprep.subr.bf16.mxu0 0
    %164 = vmatpush1.bf16.xpose.msra.mxu0 0
    %165 = vmatprep.subr.bf16.mxu0 0
    %166 = vmatpush1.bf16.xpose.msra.mxu0 0
    %167 = vmatprep.subr.bf16.mxu0 0
    %168 = vmatpush1.bf16.xpose.msra.mxu0 0
    %169 = vmatprep.mubr.bf16.mxu0 0
    %170 = vmatmul.mubr.bf16.gmra.mrb[0].mxu0 %v132
    %v171 = vpop.f32.mrb[0].mxu0
    %v172 = vadd.f32 0.0, %v171
    %v173 = vpop.f32.mrb[0].mxu0
    %v174 = vpop.f32.mrb[0].mxu0
    %v175 = vpop.f32.mrb[0].mxu0
    %176 = vdwg.mxu0
    %v178 = vsel %vm84, %v62, 0
    %v181 = vsel %vm84, %v78, 0
    %183 = vmatprep.subr.bf16.mxu0 0
    %184 = vmatpush1.bf16.xpose.msra.mxu0 %v181
    %185 = vmatprep.subr.bf16.mxu0 0
    %186 = vmatpush1.bf16.xpose.msra.mxu0 0
    %187 = vmatprep.subr.bf16.mxu0 0
    %188 = vmatpush1.bf16.xpose.msra.mxu0 0
    %189 = vmatprep.subr.bf16.mxu0 0
    %190 = vmatpush1.bf16.xpose.msra.mxu0 0
    %191 = vmatprep.subr.bf16.mxu0 0
    %192 = vmatpush1.bf16.xpose.msra.mxu0 0
    %193 = vmatprep.subr.bf16.mxu0 0
    %194 = vmatpush1.bf16.xpose.msra.mxu0 0
    %195 = vmatprep.subr.bf16.mxu0 0
    %196 = vmatpush1.bf16.xpose.msra.mxu0 0
    %197 = vmatprep.subr.bf16.mxu0 0
    %198 = vmatpush1.bf16.xpose.msra.mxu0 0
    %199 = vmatprep.subr.bf16.mxu0 0
    %200 = vmatpush1.bf16.xpose.msra.mxu0 0
    %201 = vmatprep.subr.bf16.mxu0 0
    %202 = vmatpush1.bf16.xpose.msra.mxu0 0
    %203 = vmatprep.subr.bf16.mxu0 0
    %204 = vmatpush1.bf16.xpose.msra.mxu0 0
    %205 = vmatprep.subr.bf16.mxu0 0
    %206 = vmatpush1.bf16.xpose.msra.mxu0 0
    %207 = vmatprep.subr.bf16.mxu0 0
    %208 = vmatpush1.bf16.xpose.msra.mxu0 0
    %209 = vmatprep.subr.bf16.mxu0 0
    %210 = vmatpush1.bf16.xpose.msra.mxu0 0
    %211 = vmatprep.subr.bf16.mxu0 0
    %212 = vmatpush1.bf16.xpose.msra.mxu0 0
    %213 = vmatprep.subr.bf16.mxu0 0
    %214 = vmatpush1.bf16.xpose.msra.mxu0 0
    %215 = vmatprep.mubr.bf16.mxu0 0
    %216 = vmatmul.mubr.bf16.gmra.mrb[0].mxu0 %v178
    %v217 = vpop.f32.mrb[0].mxu0
    %v218 = vadd.f32 0.0, %v217
    %v219 = vpop.f32.mrb[0].mxu0
    %v220 = vpop.f32.mrb[0].mxu0
    %v221 = vpop.f32.mrb[0].mxu0
    %222 = vdwg.mxu0
    %v224 = vsel %vm84, %v63, 0
    %v227 = vsel %vm84, %v79, 0
    %229 = vmatprep.subr.bf16.mxu0 0
    %230 = vmatpush1.bf16.xpose.msra.mxu0 %v227
    %231 = vmatprep.subr.bf16.mxu0 0
    %232 = vmatpush1.bf16.xpose.msra.mxu0 0
    %233 = vmatprep.subr.bf16.mxu0 0
    %234 = vmatpush1.bf16.xpose.msra.mxu0 0
    %235 = vmatprep.subr.bf16.mxu0 0
    %236 = vmatpush1.bf16.xpose.msra.mxu0 0
    %237 = vmatprep.subr.bf16.mxu0 0
    %238 = vmatpush1.bf16.xpose.msra.mxu0 0
    %239 = vmatprep.subr.bf16.mxu0 0
    %240 = vmatpush1.bf16.xpose.msra.mxu0 0
    %241 = vmatprep.subr.bf16.mxu0 0
    %242 = vmatpush1.bf16.xpose.msra.mxu0 0
    %243 = vmatprep.subr.bf16.mxu0 0
    %244 = vmatpush1.bf16.xpose.msra.mxu0 0
    %245 = vmatprep.subr.bf16.mxu0 0
    %246 = vmatpush1.bf16.xpose.msra.mxu0 0
    %247 = vmatprep.subr.bf16.mxu0 0
    %248 = vmatpush1.bf16.xpose.msra.mxu0 0
    %249 = vmatprep.subr.bf16.mxu0 0
    %250 = vmatpush1.bf16.xpose.msra.mxu0 0
    %251 = vmatprep.subr.bf16.mxu0 0
    %252 = vmatpush1.bf16.xpose.msra.mxu0 0
    %253 = vmatprep.subr.bf16.mxu0 0
    %254 = vmatpush1.bf16.xpose.msra.mxu0 0
    %255 = vmatprep.subr.bf16.mxu0 0
    %256 = vmatpush1.bf16.xpose.msra.mxu0 0
    %257 = vmatprep.subr.bf16.mxu0 0
    %258 = vmatpush1.bf16.xpose.msra.mxu0 0
    %259 = vmatprep.subr.bf16.mxu0 0
    %260 = vmatpush1.bf16.xpose.msra.mxu0 0
    %261 = vmatprep.mubr.bf16.mxu0 0
    %262 = vmatmul.mubr.bf16.gmra.mrb[0].mxu0 %v224
    %v263 = vpop.f32.mrb[0].mxu0
    %v264 = vadd.f32 0.0, %v263
    %v265 = vpop.f32.mrb[0].mxu0
    %v266 = vpop.f32.mrb[0].mxu0
    %v267 = vpop.f32.mrb[0].mxu0
    %268 = vdwg.mxu0
    %v270 = vsel %vm84, %v64, 0
    %v273 = vsel %vm84, %v80, 0
    %275 = vmatprep.subr.bf16.mxu0 0
    %276 = vmatpush1.bf16.xpose.msra.mxu0 %v273
    %277 = vmatprep.subr.bf16.mxu0 0
    %278 = vmatpush1.bf16.xpose.msra.mxu0 0
    %279 = vmatprep.subr.bf16.mxu0 0
    %280 = vmatpush1.bf16.xpose.msra.mxu0 0
    %281 = vmatprep.subr.bf16.mxu0 0
    %282 = vmatpush1.bf16.xpose.msra.mxu0 0
    %283 = vmatprep.subr.bf16.mxu0 0
    %284 = vmatpush1.bf16.xpose.msra.mxu0 0
    %285 = vmatprep.subr.bf16.mxu0 0
    %286 = vmatpush1.bf16.xpose.msra.mxu0 0
    %287 = vmatprep.subr.bf16.mxu0 0
    %288 = vmatpush1.bf16.xpose.msra.mxu0 0
    %289 = vmatprep.subr.bf16.mxu0 0
    %290 = vmatpush1.bf16.xpose.msra.mxu0 0
    %291 = vmatprep.subr.bf16.mxu0 0
    %292 = vmatpush1.bf16.xpose.msra.mxu0 0
    %293 = vmatprep.subr.bf16.mxu0 0
    %294 = vmatpush1.bf16.xpose.msra.mxu0 0
    %295 = vmatprep.subr.bf16.mxu0 0
    %296 = vmatpush1.bf16.xpose.msra.mxu0 0
    %297 = vmatprep.subr.bf16.mxu0 0
    %298 = vmatpush1.bf16.xpose.msra.mxu0 0
    %299 = vmatprep.subr.bf16.mxu0 0
    %300 = vmatpush1.bf16.xpose.msra.mxu0 0
    %301 = vmatprep.subr.bf16.mxu0 0
    %302 = vmatpush1.bf16.xpose.msra.mxu0 0
    %303 = vmatprep.subr.bf16.mxu0 0
    %304 = vmatpush1.bf16.xpose.msra.mxu0 0
    %305 = vmatprep.subr.bf16.mxu0 0
    %306 = vmatpush1.bf16.xpose.msra.mxu0 0
    %307 = vmatprep.mubr.bf16.mxu0 0
    %308 = vmatmul.mubr.bf16.gmra.mrb[0].mxu0 %v270
    %v309 = vpop.f32.mrb[0].mxu0
    %v310 = vadd.f32 0.0, %v309
    %v311 = vpop.f32.mrb[0].mxu0
    %v312 = vpop.f32.mrb[0].mxu0
    %v313 = vpop.f32.mrb[0].mxu0
    %314 = vdwg.mxu0
    %v316 = vsel %vm84, %v65, 0
    %v319 = vsel %vm84, %v81, 0
    %321 = vmatprep.subr.bf16.mxu0 0
    %322 = vmatpush1.bf16.xpose.msra.mxu0 %v319
    %323 = vmatprep.subr.bf16.mxu0 0
    %324 = vmatpush1.bf16.xpose.msra.mxu0 0
    %325 = vmatprep.subr.bf16.mxu0 0
    %326 = vmatpush1.bf16.xpose.msra.mxu0 0
    %327 = vmatprep.subr.bf16.mxu0 0
    %328 = vmatpush1.bf16.xpose.msra.mxu0 0
    %329 = vmatprep.subr.bf16.mxu0 0
    %330 = vmatpush1.bf16.xpose.msra.mxu0 0
    %331 = vmatprep.subr.bf16.mxu0 0
    %332 = vmatpush1.bf16.xpose.msra.mxu0 0
    %333 = vmatprep.subr.bf16.mxu0 0
    %334 = vmatpush1.bf16.xpose.msra.mxu0 0
    %335 = vmatprep.subr.bf16.mxu0 0
    %336 = vmatpush1.bf16.xpose.msra.mxu0 0
    %337 = vmatprep.subr.bf16.mxu0 0
    %338 = vmatpush1.bf16.xpose.msra.mxu0 0
    %339 = vmatprep.subr.bf16.mxu0 0
    %340 = vmatpush1.bf16.xpose.msra.mxu0 0
    %341 = vmatprep.subr.bf16.mxu0 0
    %342 = vmatpush1.bf16.xpose.msra.mxu0 0
    %343 = vmatprep.subr.bf16.mxu0 0
    %344 = vmatpush1.bf16.xpose.msra.mxu0 0
    %345 = vmatprep.subr.bf16.mxu0 0
    %346 = vmatpush1.bf16.xpose.msra.mxu0 0
    %347 = vmatprep.subr.bf16.mxu0 0
    %348 = vmatpush1.bf16.xpose.msra.mxu0 0
    %349 = vmatprep.subr.bf16.mxu0 0
    %350 = vmatpush1.bf16.xpose.msra.mxu0 0
    %351 = vmatprep.subr.bf16.mxu0 0
    %352 = vmatpush1.bf16.xpose.msra.mxu0 0
    %353 = vmatprep.mubr.bf16.mxu0 0
    %354 = vmatmul.mubr.bf16.gmra.mrb[0].mxu0 %v316
    %v355 = vpop.f32.mrb[0].mxu0
    %v356 = vadd.f32 0.0, %v355
    %v357 = vpop.f32.mrb[0].mxu0
    %v358 = vpop.f32.mrb[0].mxu0
    %v359 = vpop.f32.mrb[0].mxu0
    %360 = vdwg.mxu0
    %v362 = vsel %vm84, %v66, 0
    %v365 = vsel %vm84, %v82, 0
    %367 = vmatprep.subr.bf16.mxu0 0
    %368 = vmatpush1.bf16.xpose.msra.mxu0 %v365
    %369 = vmatprep.subr.bf16.mxu0 0
    %370 = vmatpush1.bf16.xpose.msra.mxu0 0
    %371 = vmatprep.subr.bf16.mxu0 0
    %372 = vmatpush1.bf16.xpose.msra.mxu0 0
    %373 = vmatprep.subr.bf16.mxu0 0
    %374 = vmatpush1.bf16.xpose.msra.mxu0 0
    %375 = vmatprep.subr.bf16.mxu0 0
    %376 = vmatpush1.bf16.xpose.msra.mxu0 0
    %377 = vmatprep.subr.bf16.mxu0 0
    %378 = vmatpush1.bf16.xpose.msra.mxu0 0
    %379 = vmatprep.subr.bf16.mxu0 0
    %380 = vmatpush1.bf16.xpose.msra.mxu0 0
    %381 = vmatprep.subr.bf16.mxu0 0
    %382 = vmatpush1.bf16.xpose.msra.mxu0 0
    %383 = vmatprep.subr.bf16.mxu0 0
    %384 = vmatpush1.bf16.xpose.msra.mxu0 0
    %385 = vmatprep.subr.bf16.mxu0 0
    %386 = vmatpush1.bf16.xpose.msra.mxu0 0
    %387 = vmatprep.subr.bf16.mxu0 0
    %388 = vmatpush1.bf16.xpose.msra.mxu0 0
    %389 = vmatprep.subr.bf16.mxu0 0
    %390 = vmatpush1.bf16.xpose.msra.mxu0 0
    %391 = vmatprep.subr.bf16.mxu0 0
    %392 = vmatpush1.bf16.xpose.msra.mxu0 0
    %393 = vmatprep.subr.bf16.mxu0 0
    %394 = vmatpush1.bf16.xpose.msra.mxu0 0
    %395 = vmatprep.subr.bf16.mxu0 0
    %396 = vmatpush1.bf16.xpose.msra.mxu0 0
    %397 = vmatprep.subr.bf16.mxu0 0
    %398 = vmatpush1.bf16.xpose.msra.mxu0 0
    %399 = vmatprep.mubr.bf16.mxu0 0
    %400 = vmatmul.mubr.bf16.gmra.mrb[0].mxu0 %v362
    %v401 = vpop.f32.mrb[0].mxu0
    %v402 = vadd.f32 0.0, %v401
    %v403 = vpop.f32.mrb[0].mxu0
    %v404 = vpop.f32.mrb[0].mxu0
    %v405 = vpop.f32.mrb[0].mxu0
    %406 = vdwg.mxu0
    %v408 = vsel %vm84, %v67, 0
    %v411 = vsel %vm84, %v83, 0
    %413 = vmatprep.subr.bf16.mxu0 0
    %414 = vmatpush1.bf16.xpose.msra.mxu0 %v411
    %415 = vmatprep.subr.bf16.mxu0 0
    %416 = vmatpush1.bf16.xpose.msra.mxu0 0
    %417 = vmatprep.subr.bf16.mxu0 0
    %418 = vmatpush1.bf16.xpose.msra.mxu0 0
    %419 = vmatprep.subr.bf16.mxu0 0
    %420 = vmatpush1.bf16.xpose.msra.mxu0 0
    %421 = vmatprep.subr.bf16.mxu0 0
    %422 = vmatpush1.bf16.xpose.msra.mxu0 0
    %423 = vmatprep.subr.bf16.mxu0 0
    %424 = vmatpush1.bf16.xpose.msra.mxu0 0
    %425 = vmatprep.subr.bf16.mxu0 0
    %426 = vmatpush1.bf16.xpose.msra.mxu0 0
    %427 = vmatprep.subr.bf16.mxu0 0
    %428 = vmatpush1.bf16.xpose.msra.mxu0 0
    %429 = vmatprep.subr.bf16.mxu0 0
    %430 = vmatpush1.bf16.xpose.msra.mxu0 0
    %431 = vmatprep.subr.bf16.mxu0 0
    %432 = vmatpush1.bf16.xpose.msra.mxu0 0
    %433 = vmatprep.subr.bf16.mxu0 0
    %434 = vmatpush1.bf16.xpose.msra.mxu0 0
    %435 = vmatprep.subr.bf16.mxu0 0
    %436 = vmatpush1.bf16.xpose.msra.mxu0 0
    %437 = vmatprep.subr.bf16.mxu0 0
    %438 = vmatpush1.bf16.xpose.msra.mxu0 0
    %439 = vmatprep.subr.bf16.mxu0 0
    %440 = vmatpush1.bf16.xpose.msra.mxu0 0
    %441 = vmatprep.subr.bf16.mxu0 0
    %442 = vmatpush1.bf16.xpose.msra.mxu0 0
    %443 = vmatprep.subr.bf16.mxu0 0
    %444 = vmatpush1.bf16.xpose.msra.mxu0 0
    %445 = vmatprep.mubr.bf16.mxu0 0
    %446 = vmatmul.mubr.bf16.gmra.mrb[0].mxu0 %v408
    %v447 = vpop.f32.mrb[0].mxu0
    %v448 = vadd.f32 0.0, %v447
    %v449 = vpop.f32.mrb[0].mxu0
    %v450 = vpop.f32.mrb[0].mxu0
    %v451 = vpop.f32.mrb[0].mxu0
    %452 = vdwg.mxu0
    %v453 = vmul.f32 %v126, 0.35355338
    %v454 = vmul.f32 %v172, 0.35355338
    %v455 = vmul.f32 %v218, 0.35355338
    %v456 = vmul.f32 %v264, 0.35355338
    %v457 = vmul.f32 %v310, 0.35355338
    %v458 = vmul.f32 %v356, 0.35355338
    %v459 = vmul.f32 %v402, 0.35355338
    %v460 = vmul.f32 %v448, 0.35355338
    %v461 = vlaneseq
    %v462 = vshrl.u32 %v461, 7
    %v463 = vstv %s45
    %v464 = vadd.s32 %v463, %v462
    %v465 = vlaneseq
    %v466 = vand.u32 %v465, 127
    %v467 = vstv %s46
    %v468 = vadd.s32 %v467, %v466
    %vm469 = vcmp.gt.s32.totalorder %v468, %v464
    %v470 = vsel %vm469, -inf, %v453
    %v471 = vsel %vm469, -inf, %v454
    %v472 = vsel %vm469, -inf, %v455
    %v473 = vsel %vm469, -inf, %v456
    %v474 = vsel %vm469, -inf, %v457
    %v475 = vsel %vm469, -inf, %v458
    %v476 = vsel %vm469, -inf, %v459
    %v477 = vsel %vm469, -inf, %v460
    %v478 = vld [vmem:[#allocation2] sm:$0xff]
    %v479 = vld [vmem:[#allocation2 + $0x8] sm:$0xff]
    %v480 = vld [vmem:[#allocation2 + $0x10] sm:$0xff]
    %v481 = vld [vmem:[#allocation2 + $0x18] sm:$0xff]
    %v482 = vld [vmem:[#allocation2 + $0x20] sm:$0xff]
    %v483 = vld [vmem:[#allocation2 + $0x28] sm:$0xff]
    %v484 = vld [vmem:[#allocation2 + $0x30] sm:$0xff]
    %v485 = vld [vmem:[#allocation2 + $0x38] sm:$0xff]
    %v486 = vsel %vm84, %v470, -inf
    %487 = vmax.xlane.f32.xlu0 %v486
    %v488 = vpop.xlane.xlu0 %487
    %v489 = vsel %vm84, %v471, -inf
    %490 = vmax.xlane.f32.xlu0 %v489
    %v491 = vpop.xlane.xlu0 %490
    %v492 = vsel %vm84, %v472, -inf
    %493 = vmax.xlane.f32.xlu0 %v492
    %v494 = vpop.xlane.xlu0 %493
    %v495 = vsel %vm84, %v473, -inf
    %496 = vmax.xlane.f32.xlu0 %v495
    %v497 = vpop.xlane.xlu0 %496
    %v498 = vsel %vm84, %v474, -inf
    %499 = vmax.xlane.f32.xlu0 %v498
    %v500 = vpop.xlane.xlu0 %499
    %v501 = vsel %vm84, %v475, -inf
    %502 = vmax.xlane.f32.xlu0 %v501
    %v503 = vpop.xlane.xlu0 %502
    %v504 = vsel %vm84, %v476, -inf
    %505 = vmax.xlane.f32.xlu0 %v504
    %v506 = vpop.xlane.xlu0 %505
    %v507 = vsel %vm84, %v477, -inf
    %508 = vmax.xlane.f32.xlu0 %v507
    %v509 = vpop.xlane.xlu0 %508
    %v510 = vmax.f32 %v478, %v488
    %v511 = vmax.f32 %v479, %v491
    %v512 = vmax.f32 %v480, %v494
    %v513 = vmax.f32 %v481, %v497
    %v514 = vmax.f32 %v482, %v500
    %v515 = vmax.f32 %v483, %v503
    %v516 = vmax.f32 %v484, %v506
    %v517 = vmax.f32 %v485, %v509
    %v518 = vsub.f32 %v478, %v510
    %v519 = vsub.f32 %v479, %v511
    %v520 = vsub.f32 %v480, %v512
    %v521 = vsub.f32 %v481, %v513
    %v522 = vsub.f32 %v482, %v514
    %v523 = vsub.f32 %v483, %v515
    %v524 = vsub.f32 %v484, %v516
    %v525 = vsub.f32 %v485, %v517
    %v526 = vmul.f32 %v518, 1.442695
    %v527 = vpow.pop %v526
    %v528 = vmul.f32 %v519, 1.442695
    %v529 = vpow.pop %v528
    %v530 = vmul.f32 %v520, 1.442695
    %v531 = vpow.pop %v530
    %v532 = vmul.f32 %v521, 1.442695
    %v533 = vpow.pop %v532
    %v534 = vmul.f32 %v522, 1.442695
    %v535 = vpow.pop %v534
    %v536 = vmul.f32 %v523, 1.442695
    %v537 = vpow.pop %v536
    %v538 = vmul.f32 %v524, 1.442695
    %v539 = vpow.pop %v538
    %v540 = vmul.f32 %v525, 1.442695
    %v541 = vpow.pop %v540
    %543 = vset.pattern.permute.xlu0 0
    %544 = vperm.xlu0 %543, %v510
    %v545 = vpop.permute.xlu0 %544
    %548 = vset.pattern.permute.xlu0 0
    %549 = vperm.xlu0 %548, %v511
    %v550 = vpop.permute.xlu0 %549
    %553 = vset.pattern.permute.xlu0 0
    %554 = vperm.xlu0 %553, %v512
    %v555 = vpop.permute.xlu0 %554
    %558 = vset.pattern.permute.xlu0 0
    %559 = vperm.xlu0 %558, %v513
    %v560 = vpop.permute.xlu0 %559
    %563 = vset.pattern.permute.xlu0 0
    %564 = vperm.xlu0 %563, %v514
    %v565 = vpop.permute.xlu0 %564
    %568 = vset.pattern.permute.xlu0 0
    %569 = vperm.xlu0 %568, %v515
    %v570 = vpop.permute.xlu0 %569
    %573 = vset.pattern.permute.xlu0 0
    %574 = vperm.xlu0 %573, %v516
    %v575 = vpop.permute.xlu0 %574
    %578 = vset.pattern.permute.xlu0 0
    %579 = vperm.xlu0 %578, %v517
    %v580 = vpop.permute.xlu0 %579
    %v582 = vsub.f32 %v470, %v545
    %v583 = vsub.f32 %v471, %v550
    %v584 = vsub.f32 %v472, %v555
    %v585 = vsub.f32 %v473, %v560
    %v586 = vsub.f32 %v474, %v565
    %v587 = vsub.f32 %v475, %v570
    %v588 = vsub.f32 %v476, %v575
    %v589 = vsub.f32 %v477, %v580
    %v590 = vmul.f32 %v582, 1.442695
    %v591 = vpow.pop %v590
    %v592 = vmul.f32 %v583, 1.442695
    %v593 = vpow.pop %v592
    %v594 = vmul.f32 %v584, 1.442695
    %v595 = vpow.pop %v594
    %v596 = vmul.f32 %v585, 1.442695
    %v597 = vpow.pop %v596
    %v598 = vmul.f32 %v586, 1.442695
    %v599 = vpow.pop %v598
    %v600 = vmul.f32 %v587, 1.442695
    %v601 = vpow.pop %v600
    %v602 = vmul.f32 %v588, 1.442695
    %v603 = vpow.pop %v602
    %v604 = vmul.f32 %v589, 1.442695
    %v605 = vpow.pop %v604
    %v606 = vld [vmem:[#allocation3] sm:$0xff]
    %v607 = vld [vmem:[#allocation3 + $0x8] sm:$0xff]
    %v608 = vld [vmem:[#allocation3 + $0x10] sm:$0xff]
    %v609 = vld [vmem:[#allocation3 + $0x18] sm:$0xff]
    %v610 = vld [vmem:[#allocation3 + $0x20] sm:$0xff]
    %v611 = vld [vmem:[#allocation3 + $0x28] sm:$0xff]
    %v612 = vld [vmem:[#allocation3 + $0x30] sm:$0xff]
    %v613 = vld [vmem:[#allocation3 + $0x38] sm:$0xff]
    %v614 = vmul.f32 %v527, %v606
    %v615 = vmul.f32 %v529, %v607
    %v616 = vmul.f32 %v531, %v608
    %v617 = vmul.f32 %v533, %v609
    %v618 = vmul.f32 %v535, %v610
    %v619 = vmul.f32 %v537, %v611
    %v620 = vmul.f32 %v539, %v612
    %v621 = vmul.f32 %v541, %v613
    %v622 = vsel %vm84, %v591, 0.0
    %623 = vadd.xlane.f32.xlu0 %v622
    %v624 = vpop.xlane.xlu0 %623
    %v625 = vsel %vm84, %v593, 0.0
    %626 = vadd.xlane.f32.xlu0 %v625
    %v627 = vpop.xlane.xlu0 %626
    %v628 = vsel %vm84, %v595, 0.0
    %629 = vadd.xlane.f32.xlu0 %v628
    %v630 = vpop.xlane.xlu0 %629
    %v631 = vsel %vm84, %v597, 0.0
    %632 = vadd.xlane.f32.xlu0 %v631
    %v633 = vpop.xlane.xlu0 %632
    %v634 = vsel %vm84, %v599, 0.0
    %635 = vadd.xlane.f32.xlu0 %v634
    %v636 = vpop.xlane.xlu0 %635
    %v637 = vsel %vm84, %v601, 0.0
    %638 = vadd.xlane.f32.xlu0 %v637
    %v639 = vpop.xlane.xlu0 %638
    %v640 = vsel %vm84, %v603, 0.0
    %641 = vadd.xlane.f32.xlu0 %v640
    %v642 = vpop.xlane.xlu0 %641
    %v643 = vsel %vm84, %v605, 0.0
    %644 = vadd.xlane.f32.xlu0 %v643
    %v645 = vpop.xlane.xlu0 %644
    %v646 = vadd.f32 %v614, %v624
    %v647 = vadd.f32 %v615, %v627
    %v648 = vadd.f32 %v616, %v630
    %v649 = vadd.f32 %v617, %v633
    %v650 = vadd.f32 %v618, %v636
    %v651 = vadd.f32 %v619, %v639
    %v652 = vadd.f32 %v620, %v642
    %v653 = vadd.f32 %v621, %v645
    %vm654 = vcmask 7168
    %655 = vst.msk [vmem:[#allocation3] sm:$0xff] %vm654, %v646
    %656 = vst.msk [vmem:[#allocation3 + $0x8] sm:$0xff] %vm654, %v647
    %657 = vst.msk [vmem:[#allocation3 + $0x10] sm:$0xff] %vm654, %v648
    %658 = vst.msk [vmem:[#allocation3 + $0x18] sm:$0xff] %vm654, %v649
    %659 = vst.msk [vmem:[#allocation3 + $0x20] sm:$0xff] %vm654, %v650
    %660 = vst.msk [vmem:[#allocation3 + $0x28] sm:$0xff] %vm654, %v651
    %661 = vst.msk [vmem:[#allocation3 + $0x30] sm:$0xff] %vm654, %v652
    %662 = vst.msk [vmem:[#allocation3 + $0x38] sm:$0xff] %vm654, %v653
    %v663 = vld [vmem:[#allocation4] sm:$0xff]
    %v664 = vld [vmem:[#allocation4 + $0x8] sm:$0xff]
    %v665 = vld [vmem:[#allocation4 + $0x10] sm:$0xff]
    %v666 = vld [vmem:[#allocation4 + $0x18] sm:$0xff]
    %v667 = vld [vmem:[#allocation4 + $0x20] sm:$0xff]
    %v668 = vld [vmem:[#allocation4 + $0x28] sm:$0xff]
    %v669 = vld [vmem:[#allocation4 + $0x30] sm:$0xff]
    %v670 = vld [vmem:[#allocation4 + $0x38] sm:$0xff]
    %672 = vset.pattern.permute.xlu0 0
    %673 = vperm.xlu0 %672, %v527
    %v674 = vpop.permute.xlu0 %673
    %677 = vset.pattern.permute.xlu0 0
    %678 = vperm.xlu0 %677, %v529
    %v679 = vpop.permute.xlu0 %678
    %682 = vset.pattern.permute.xlu0 0
    %683 = vperm.xlu0 %682, %v531
    %v684 = vpop.permute.xlu0 %683
    %687 = vset.pattern.permute.xlu0 0
    %688 = vperm.xlu0 %687, %v533
    %v689 = vpop.permute.xlu0 %688
    %692 = vset.pattern.permute.xlu0 0
    %693 = vperm.xlu0 %692, %v535
    %v694 = vpop.permute.xlu0 %693
    %697 = vset.pattern.permute.xlu0 0
    %698 = vperm.xlu0 %697, %v537
    %v699 = vpop.permute.xlu0 %698
    %702 = vset.pattern.permute.xlu0 0
    %703 = vperm.xlu0 %702, %v539
    %v704 = vpop.permute.xlu0 %703
    %707 = vset.pattern.permute.xlu0 0
    %708 = vperm.xlu0 %707, %v541
    %v709 = vpop.permute.xlu0 %708
    %v711 = vmul.f32 %v674, %v663
    %v712 = vmul.f32 %v679, %v664
    %v713 = vmul.f32 %v684, %v665
    %v714 = vmul.f32 %v689, %v666
    %v715 = vmul.f32 %v694, %v667
    %v716 = vmul.f32 %v699, %v668
    %v717 = vmul.f32 %v704, %v669
    %v718 = vmul.f32 %v709, %v670
    %v719 = vpack.c.bf16 %v591, %v591
    %v720 = vpack.c.bf16 %v593, %v593
    %v721 = vpack.c.bf16 %v595, %v595
    %v722 = vpack.c.bf16 %v597, %v597
    %v723 = vpack.c.bf16 %v599, %v599
    %v724 = vpack.c.bf16 %v601, %v601
    %v725 = vpack.c.bf16 %v603, %v603
    %v726 = vpack.c.bf16 %v605, %v605
    %v727 = vld [vmem:[%s2] sm:$0xff]
    %v728 = vld [vmem:[%s2 + $0x8] sm:$0xff]
    %v729 = vld [vmem:[%s2 + $0x10] sm:$0xff]
    %v730 = vld [vmem:[%s2 + $0x18] sm:$0xff]
    %v731 = vld [vmem:[%s2 + $0x20] sm:$0xff]
    %v732 = vld [vmem:[%s2 + $0x28] sm:$0xff]
    %v733 = vld [vmem:[%s2 + $0x30] sm:$0xff]
    %v734 = vld [vmem:[%s2 + $0x38] sm:$0xff]
    %v735 = vpack.c.bf16 %v727, %v727
    %v736 = vpack.c.bf16 %v728, %v728
    %v737 = vpack.c.bf16 %v729, %v729
    %v738 = vpack.c.bf16 %v730, %v730
    %v739 = vpack.c.bf16 %v731, %v731
    %v740 = vpack.c.bf16 %v732, %v732
    %v741 = vpack.c.bf16 %v733, %v733
    %v742 = vpack.c.bf16 %v734, %v734
    %v744 = vsel %vm84, %v719, 0
    %vm746 = vcmask 1043456
    %v748 = vsel %vm746, %v735, 0
    %750 = vmatprep.subr.bf16.mxu0 0
    %751 = vmatpush1.bf16.msra.mxu0 %v748
    %752 = vmatprep.subr.bf16.mxu0 0
    %753 = vmatpush1.bf16.msra.mxu0 0
    %754 = vmatprep.subr.bf16.mxu0 0
    %755 = vmatpush1.bf16.msra.mxu0 0
    %756 = vmatprep.subr.bf16.mxu0 0
    %757 = vmatpush1.bf16.msra.mxu0 0
    %758 = vmatprep.subr.bf16.mxu0 0
    %759 = vmatpush1.bf16.msra.mxu0 0
    %760 = vmatprep.subr.bf16.mxu0 0
    %761 = vmatpush1.bf16.msra.mxu0 0
    %762 = vmatprep.subr.bf16.mxu0 0
    %763 = vmatpush1.bf16.msra.mxu0 0
    %764 = vmatprep.subr.bf16.mxu0 0
    %765 = vmatpush1.bf16.msra.mxu0 0
    %766 = vmatprep.subr.bf16.mxu0 0
    %767 = vmatpush1.bf16.msra.mxu0 0
    %768 = vmatprep.subr.bf16.mxu0 0
    %769 = vmatpush1.bf16.msra.mxu0 0
    %770 = vmatprep.subr.bf16.mxu0 0
    %771 = vmatpush1.bf16.msra.mxu0 0
    %772 = vmatprep.subr.bf16.mxu0 0
    %773 = vmatpush1.bf16.msra.mxu0 0
    %774 = vmatprep.subr.bf16.mxu0 0
    %775 = vmatpush1.bf16.msra.mxu0 0
    %776 = vmatprep.subr.bf16.mxu0 0
    %777 = vmatpush1.bf16.msra.mxu0 0
    %778 = vmatprep.subr.bf16.mxu0 0
    %779 = vmatpush1.bf16.msra.mxu0 0
    %780 = vmatprep.subr.bf16.mxu0 0
    %781 = vmatpush1.bf16.msra.mxu0 0
    %782 = vmatprep.mubr.bf16.mxu0 0
    %783 = vmatmul.mubr.bf16.gmra.mrb[0].mxu0 %v744
    %v784 = vpop.f32.mrb[0].mxu0
    %v785 = vadd.f32 0.0, %v784
    %v786 = vpop.f32.mrb[0].mxu0
    %v787 = vpop.f32.mrb[0].mxu0
    %v788 = vpop.f32.mrb[0].mxu0
    %789 = vdwg.mxu0
    %v791 = vsel %vm84, %v720, 0
    %v794 = vsel %vm746, %v736, 0
    %796 = vmatprep.subr.bf16.mxu0 0
    %797 = vmatpush1.bf16.msra.mxu0 %v794
    %798 = vmatprep.subr.bf16.mxu0 0
    %799 = vmatpush1.bf16.msra.mxu0 0
    %800 = vmatprep.subr.bf16.mxu0 0
    %801 = vmatpush1.bf16.msra.mxu0 0
    %802 = vmatprep.subr.bf16.mxu0 0
    %803 = vmatpush1.bf16.msra.mxu0 0
    %804 = vmatprep.subr.bf16.mxu0 0
    %805 = vmatpush1.bf16.msra.mxu0 0
    %806 = vmatprep.subr.bf16.mxu0 0
    %807 = vmatpush1.bf16.msra.mxu0 0
    %808 = vmatprep.subr.bf16.mxu0 0
    %809 = vmatpush1.bf16.msra.mxu0 0
    %810 = vmatprep.subr.bf16.mxu0 0
    %811 = vmatpush1.bf16.msra.mxu0 0
    %812 = vmatprep.subr.bf16.mxu0 0
    %813 = vmatpush1.bf16.msra.mxu0 0
    %814 = vmatprep.subr.bf16.mxu0 0
    %815 = vmatpush1.bf16.msra.mxu0 0
    %816 = vmatprep.subr.bf16.mxu0 0
    %817 = vmatpush1.bf16.msra.mxu0 0
    %818 = vmatprep.subr.bf16.mxu0 0
    %819 = vmatpush1.bf16.msra.mxu0 0
    %820 = vmatprep.subr.bf16.mxu0 0
    %821 = vmatpush1.bf16.msra.mxu0 0
    %822 = vmatprep.subr.bf16.mxu0 0
    %823 = vmatpush1.bf16.msra.mxu0 0
    %824 = vmatprep.subr.bf16.mxu0 0
    %825 = vmatpush1.bf16.msra.mxu0 0
    %826 = vmatprep.subr.bf16.mxu0 0
    %827 = vmatpush1.bf16.msra.mxu0 0
    %828 = vmatprep.mubr.bf16.mxu0 0
    %829 = vmatmul.mubr.bf16.gmra.mrb[0].mxu0 %v791
    %v830 = vpop.f32.mrb[0].mxu0
    %v831 = vadd.f32 0.0, %v830
    %v832 = vpop.f32.mrb[0].mxu0
    %v833 = vpop.f32.mrb[0].mxu0
    %v834 = vpop.f32.mrb[0].mxu0
    %835 = vdwg.mxu0
    %v837 = vsel %vm84, %v721, 0
    %v840 = vsel %vm746, %v737, 0
    %842 = vmatprep.subr.bf16.mxu0 0
    %843 = vmatpush1.bf16.msra.mxu0 %v840
    %844 = vmatprep.subr.bf16.mxu0 0
    %845 = vmatpush1.bf16.msra.mxu0 0
    %846 = vmatprep.subr.bf16.mxu0 0
    %847 = vmatpush1.bf16.msra.mxu0 0
    %848 = vmatprep.subr.bf16.mxu0 0
    %849 = vmatpush1.bf16.msra.mxu0 0
    %850 = vmatprep.subr.bf16.mxu0 0
    %851 = vmatpush1.bf16.msra.mxu0 0
    %852 = vmatprep.subr.bf16.mxu0 0
    %853 = vmatpush1.bf16.msra.mxu0 0
    %854 = vmatprep.subr.bf16.mxu0 0
    %855 = vmatpush1.bf16.msra.mxu0 0
    %856 = vmatprep.subr.bf16.mxu0 0
    %857 = vmatpush1.bf16.msra.mxu0 0
    %858 = vmatprep.subr.bf16.mxu0 0
    %859 = vmatpush1.bf16.msra.mxu0 0
    %860 = vmatprep.subr.bf16.mxu0 0
    %861 = vmatpush1.bf16.msra.mxu0 0
    %862 = vmatprep.subr.bf16.mxu0 0
    %863 = vmatpush1.bf16.msra.mxu0 0
    %864 = vmatprep.subr.bf16.mxu0 0
    %865 = vmatpush1.bf16.msra.mxu0 0
    %866 = vmatprep.subr.bf16.mxu0 0
    %867 = vmatpush1.bf16.msra.mxu0 0
    %868 = vmatprep.subr.bf16.mxu0 0
    %869 = vmatpush1.bf16.msra.mxu0 0
    %870 = vmatprep.subr.bf16.mxu0 0
    %871 = vmatpush1.bf16.msra.mxu0 0
    %872 = vmatprep.subr.bf16.mxu0 0
    %873 = vmatpush1.bf16.msra.mxu0 0
    %874 = vmatprep.mubr.bf16.mxu0 0
    %875 = vmatmul.mubr.bf16.gmra.mrb[0].mxu0 %v837
    %v876 = vpop.f32.mrb[0].mxu0
    %v877 = vadd.f32 0.0, %v876
    %v878 = vpop.f32.mrb[0].mxu0
    %v879 = vpop.f32.mrb[0].mxu0
    %v880 = vpop.f32.mrb[0].mxu0
    %881 = vdwg.mxu0
    %v883 = vsel %vm84, %v722, 0
    %v886 = vsel %vm746, %v738, 0
    %888 = vmatprep.subr.bf16.mxu0 0
    %889 = vmatpush1.bf16.msra.mxu0 %v886
    %890 = vmatprep.subr.bf16.mxu0 0
    %891 = vmatpush1.bf16.msra.mxu0 0
    %892 = vmatprep.subr.bf16.mxu0 0
    %893 = vmatpush1.bf16.msra.mxu0 0
    %894 = vmatprep.subr.bf16.mxu0 0
    %895 = vmatpush1.bf16.msra.mxu0 0
    %896 = vmatprep.subr.bf16.mxu0 0
    %897 = vmatpush1.bf16.msra.mxu0 0
    %898 = vmatprep.subr.bf16.mxu0 0
    %899 = vmatpush1.bf16.msra.mxu0 0
    %900 = vmatprep.subr.bf16.mxu0 0
    %901 = vmatpush1.bf16.msra.mxu0 0
    %902 = vmatprep.subr.bf16.mxu0 0
    %903 = vmatpush1.bf16.msra.mxu0 0
    %904 = vmatprep.subr.bf16.mxu0 0
    %905 = vmatpush1.bf16.msra.mxu0 0
    %906 = vmatprep.subr.bf16.mxu0 0
    %907 = vmatpush1.bf16.msra.mxu0 0
    %908 = vmatprep.subr.bf16.mxu0 0
    %909 = vmatpush1.bf16.msra.mxu0 0
    %910 = vmatprep.subr.bf16.mxu0 0
    %911 = vmatpush1.bf16.msra.mxu0 0
    %912 = vmatprep.subr.bf16.mxu0 0
    %913 = vmatpush1.bf16.msra.mxu0 0
    %914 = vmatprep.subr.bf16.mxu0 0
    %915 = vmatpush1.bf16.msra.mxu0 0
    %916 = vmatprep.subr.bf16.mxu0 0
    %917 = vmatpush1.bf16.msra.mxu0 0
    %918 = vmatprep.subr.bf16.mxu0 0
    %919 = vmatpush1.bf16.msra.mxu0 0
    %920 = vmatprep.mubr.bf16.mxu0 0
    %921 = vmatmul.mubr.bf16.gmra.mrb[0].mxu0 %v883
    %v922 = vpop.f32.mrb[0].mxu0
    %v923 = vadd.f32 0.0, %v922
    %v924 = vpop.f32.mrb[0].mxu0
    %v925 = vpop.f32.mrb[0].mxu0
    %v926 = vpop.f32.mrb[0].mxu0
    %927 = vdwg.mxu0
    %v929 = vsel %vm84, %v723, 0
    %v932 = vsel %vm746, %v739, 0
    %934 = vmatprep.subr.bf16.mxu0 0
    %935 = vmatpush1.bf16.msra.mxu0 %v932
    %936 = vmatprep.subr.bf16.mxu0 0
    %937 = vmatpush1.bf16.msra.mxu0 0
    %938 = vmatprep.subr.bf16.mxu0 0
    %939 = vmatpush1.bf16.msra.mxu0 0
    %940 = vmatprep.subr.bf16.mxu0 0
    %941 = vmatpush1.bf16.msra.mxu0 0
    %942 = vmatprep.subr.bf16.mxu0 0
    %943 = vmatpush1.bf16.msra.mxu0 0
    %944 = vmatprep.subr.bf16.mxu0 0
    %945 = vmatpush1.bf16.msra.mxu0 0
    %946 = vmatprep.subr.bf16.mxu0 0
    %947 = vmatpush1.bf16.msra.mxu0 0
    %948 = vmatprep.subr.bf16.mxu0 0
    %949 = vmatpush1.bf16.msra.mxu0 0
    %950 = vmatprep.subr.bf16.mxu0 0
    %951 = vmatpush1.bf16.msra.mxu0 0
    %952 = vmatprep.subr.bf16.mxu0 0
    %953 = vmatpush1.bf16.msra.mxu0 0
    %954 = vmatprep.subr.bf16.mxu0 0
    %955 = vmatpush1.bf16.msra.mxu0 0
    %956 = vmatprep.subr.bf16.mxu0 0
    %957 = vmatpush1.bf16.msra.mxu0 0
    %958 = vmatprep.subr.bf16.mxu0 0
    %959 = vmatpush1.bf16.msra.mxu0 0
    %960 = vmatprep.subr.bf16.mxu0 0
    %961 = vmatpush1.bf16.msra.mxu0 0
    %962 = vmatprep.subr.bf16.mxu0 0
    %963 = vmatpush1.bf16.msra.mxu0 0
    %964 = vmatprep.subr.bf16.mxu0 0
    %965 = vmatpush1.bf16.msra.mxu0 0
    %966 = vmatprep.mubr.bf16.mxu0 0
    %967 = vmatmul.mubr.bf16.gmra.mrb[0].mxu0 %v929
    %v968 = vpop.f32.mrb[0].mxu0
    %v969 = vadd.f32 0.0, %v968
    %v970 = vpop.f32.mrb[0].mxu0
    %v971 = vpop.f32.mrb[0].mxu0
    %v972 = vpop.f32.mrb[0].mxu0
    %973 = vdwg.mxu0
    %v975 = vsel %vm84, %v724, 0
    %v978 = vsel %vm746, %v740, 0
    %980 = vmatprep.subr.bf16.mxu0 0
    %981 = vmatpush1.bf16.msra.mxu0 %v978
    %982 = vmatprep.subr.bf16.mxu0 0
    %983 = vmatpush1.bf16.msra.mxu0 0
    %984 = vmatprep.subr.bf16.mxu0 0
    %985 = vmatpush1.bf16.msra.mxu0 0
    %986 = vmatprep.subr.bf16.mxu0 0
    %987 = vmatpush1.bf16.msra.mxu0 0
    %988 = vmatprep.subr.bf16.mxu0 0
    %989 = vmatpush1.bf16.msra.mxu0 0
    %990 = vmatprep.subr.bf16.mxu0 0
    %991 = vmatpush1.bf16.msra.mxu0 0
    %992 = vmatprep.subr.bf16.mxu0 0
    %993 = vmatpush1.bf16.msra.mxu0 0
    %994 = vmatprep.subr.bf16.mxu0 0
    %995 = vmatpush1.bf16.msra.mxu0 0
    %996 = vmatprep.subr.bf16.mxu0 0
    %997 = vmatpush1.bf16.msra.mxu0 0
    %998 = vmatprep.subr.bf16.mxu0 0
    %999 = vmatpush1.bf16.msra.mxu0 0
    %1000 = vmatprep.subr.bf16.mxu0 0
    %1001 = vmatpush1.bf16.msra.mxu0 0
    %1002 = vmatprep.subr.bf16.mxu0 0
    %1003 = vmatpush1.bf16.msra.mxu0 0
    %1004 = vmatprep.subr.bf16.mxu0 0
    %1005 = vmatpush1.bf16.msra.mxu0 0
    %1006 = vmatprep.subr.bf16.mxu0 0
    %1007 = vmatpush1.bf16.msra.mxu0 0
    %1008 = vmatprep.subr.bf16.mxu0 0
    %1009 = vmatpush1.bf16.msra.mxu0 0
    %1010 = vmatprep.subr.bf16.mxu0 0
    %1011 = vmatpush1.bf16.msra.mxu0 0
    %1012 = vmatprep.mubr.bf16.mxu0 0
    %1013 = vmatmul.mubr.bf16.gmra.mrb[0].mxu0 %v975
    %v1014 = vpop.f32.mrb[0].mxu0
    %v1015 = vadd.f32 0.0, %v1014
    %v1016 = vpop.f32.mrb[0].mxu0
    %v1017 = vpop.f32.mrb[0].mxu0
    %v1018 = vpop.f32.mrb[0].mxu0
    %1019 = vdwg.mxu0
    %v1021 = vsel %vm84, %v725, 0
    %v1024 = vsel %vm746, %v741, 0
    %1026 = vmatprep.subr.bf16.mxu0 0
    %1027 = vmatpush1.bf16.msra.mxu0 %v1024
    %1028 = vmatprep.subr.bf16.mxu0 0
    %1029 = vmatpush1.bf16.msra.mxu0 0
    %1030 = vmatprep.subr.bf16.mxu0 0
    %1031 = vmatpush1.bf16.msra.mxu0 0
    %1032 = vmatprep.subr.bf16.mxu0 0
    %1033 = vmatpush1.bf16.msra.mxu0 0
    %1034 = vmatprep.subr.bf16.mxu0 0
    %1035 = vmatpush1.bf16.msra.mxu0 0
    %1036 = vmatprep.subr.bf16.mxu0 0
    %1037 = vmatpush1.bf16.msra.mxu0 0
    %1038 = vmatprep.subr.bf16.mxu0 0
    %1039 = vmatpush1.bf16.msra.mxu0 0
    %1040 = vmatprep.subr.bf16.mxu0 0
    %1041 = vmatpush1.bf16.msra.mxu0 0
    %1042 = vmatprep.subr.bf16.mxu0 0
    %1043 = vmatpush1.bf16.msra.mxu0 0
    %1044 = vmatprep.subr.bf16.mxu0 0
    %1045 = vmatpush1.bf16.msra.mxu0 0
    %1046 = vmatprep.subr.bf16.mxu0 0
    %1047 = vmatpush1.bf16.msra.mxu0 0
    %1048 = vmatprep.subr.bf16.mxu0 0
    %1049 = vmatpush1.bf16.msra.mxu0 0
    %1050 = vmatprep.subr.bf16.mxu0 0
    %1051 = vmatpush1.bf16.msra.mxu0 0
    %1052 = vmatprep.subr.bf16.mxu0 0
    %1053 = vmatpush1.bf16.msra.mxu0 0
    %1054 = vmatprep.subr.bf16.mxu0 0
    %1055 = vmatpush1.bf16.msra.mxu0 0
    %1056 = vmatprep.subr.bf16.mxu0 0
    %1057 = vmatpush1.bf16.msra.mxu0 0
    %1058 = vmatprep.mubr.bf16.mxu0 0
    %1059 = vmatmul.mubr.bf16.gmra.mrb[0].mxu0 %v1021
    %v1060 = vpop.f32.mrb[0].mxu0
    %v1061 = vadd.f32 0.0, %v1060
    %v1062 = vpop.f32.mrb[0].mxu0
    %v1063 = vpop.f32.mrb[0].mxu0
    %v1064 = vpop.f32.mrb[0].mxu0
    %1065 = vdwg.mxu0
    %v1067 = vsel %vm84, %v726, 0
    %v1070 = vsel %vm746, %v742, 0
    %1072 = vmatprep.subr.bf16.mxu0 0
    %1073 = vmatpush1.bf16.msra.mxu0 %v1070
    %1074 = vmatprep.subr.bf16.mxu0 0
    %1075 = vmatpush1.bf16.msra.mxu0 0
    %1076 = vmatprep.subr.bf16.mxu0 0
    %1077 = vmatpush1.bf16.msra.mxu0 0
    %1078 = vmatprep.subr.bf16.mxu0 0
    %1079 = vmatpush1.bf16.msra.mxu0 0
    %1080 = vmatprep.subr.bf16.mxu0 0
    %1081 = vmatpush1.bf16.msra.mxu0 0
    %1082 = vmatprep.subr.bf16.mxu0 0
    %1083 = vmatpush1.bf16.msra.mxu0 0
    %1084 = vmatprep.subr.bf16.mxu0 0
    %1085 = vmatpush1.bf16.msra.mxu0 0
    %1086 = vmatprep.subr.bf16.mxu0 0
    %1087 = vmatpush1.bf16.msra.mxu0 0
    %1088 = vmatprep.subr.bf16.mxu0 0
    %1089 = vmatpush1.bf16.msra.mxu0 0
    %1090 = vmatprep.subr.bf16.mxu0 0
    %1091 = vmatpush1.bf16.msra.mxu0 0
    %1092 = vmatprep.subr.bf16.mxu0 0
    %1093 = vmatpush1.bf16.msra.mxu0 0
    %1094 = vmatprep.subr.bf16.mxu0 0
    %1095 = vmatpush1.bf16.msra.mxu0 0
    %1096 = vmatprep.subr.bf16.mxu0 0
    %1097 = vmatpush1.bf16.msra.mxu0 0
    %1098 = vmatprep.subr.bf16.mxu0 0
    %1099 = vmatpush1.bf16.msra.mxu0 0
    %1100 = vmatprep.subr.bf16.mxu0 0
    %1101 = vmatpush1.bf16.msra.mxu0 0
    %1102 = vmatprep.subr.bf16.mxu0 0
    %1103 = vmatpush1.bf16.msra.mxu0 0
    %1104 = vmatprep.mubr.bf16.mxu0 0
    %1105 = vmatmul.mubr.bf16.gmra.mrb[0].mxu0 %v1067
    %v1106 = vpop.f32.mrb[0].mxu0
    %v1107 = vadd.f32 0.0, %v1106
    %v1108 = vpop.f32.mrb[0].mxu0
    %v1109 = vpop.f32.mrb[0].mxu0
    %v1110 = vpop.f32.mrb[0].mxu0
    %1111 = vdwg.mxu0
    %v1112 = vadd.f32 %v711, %v785
    %v1113 = vadd.f32 %v712, %v831
    %v1114 = vadd.f32 %v713, %v877
    %v1115 = vadd.f32 %v714, %v923
    %v1116 = vadd.f32 %v715, %v969
    %v1117 = vadd.f32 %v716, %v1015
    %v1118 = vadd.f32 %v717, %v1061
    %v1119 = vadd.f32 %v718, %v1107
    %1120 = vst.msk [vmem:[#allocation4] sm:$0xff] %vm84, %v1112
    %1121 = vst.msk [vmem:[#allocation4 + $0x8] sm:$0xff] %vm84, %v1113
    %1122 = vst.msk [vmem:[#allocation4 + $0x10] sm:$0xff] %vm84, %v1114
    %1123 = vst.msk [vmem:[#allocation4 + $0x18] sm:$0xff] %vm84, %v1115
    %1124 = vst.msk [vmem:[#allocation4 + $0x20] sm:$0xff] %vm84, %v1116
    %1125 = vst.msk [vmem:[#allocation4 + $0x28] sm:$0xff] %vm84, %v1117
    %1126 = vst.msk [vmem:[#allocation4 + $0x30] sm:$0xff] %vm84, %v1118
    %1127 = vst.msk [vmem:[#allocation4 + $0x38] sm:$0xff] %vm84, %v1119
    %1128 = vst.msk [vmem:[#allocation2] sm:$0xff] %vm654, %v510
    %1129 = vst.msk [vmem:[#allocation2 + $0x8] sm:$0xff] %vm654, %v511
    %1130 = vst.msk [vmem:[#allocation2 + $0x10] sm:$0xff] %vm654, %v512
    %1131 = vst.msk [vmem:[#allocation2 + $0x18] sm:$0xff] %vm654, %v513
    %1132 = vst.msk [vmem:[#allocation2 + $0x20] sm:$0xff] %vm654, %v514
    %1133 = vst.msk [vmem:[#allocation2 + $0x28] sm:$0xff] %vm654, %v515
    %1134 = vst.msk [vmem:[#allocation2 + $0x30] sm:$0xff] %vm654, %v516
    %1135 = vst.msk [vmem:[#allocation2 + $0x38] sm:$0xff] %vm654, %v517
  $region21: #{transformer_forward.12} parent=0 // pred_fallthru
    _
  // Predicated region
  $region22: #{transformer_forward.12} parent=0 // pred_check
    %p1136 = pneg %p15
  $region23: #{transformer_forward.12} parent=0 // pred_check_branch
    %1138 = sbr.rel (%p1136) target = $region25
  $region24: #{transformer_forward.12} parent=0 // pred_region
    %v1139 = vld [vmem:[#allocation3] sm:$0xff]
    %v1140 = vld [vmem:[#allocation3 + $0x8] sm:$0xff]
    %v1141 = vld [vmem:[#allocation3 + $0x10] sm:$0xff]
    %v1142 = vld [vmem:[#allocation3 + $0x18] sm:$0xff]
    %v1143 = vld [vmem:[#allocation3 + $0x20] sm:$0xff]
    %v1144 = vld [vmem:[#allocation3 + $0x28] sm:$0xff]
    %v1145 = vld [vmem:[#allocation3 + $0x30] sm:$0xff]
    %v1146 = vld [vmem:[#allocation3 + $0x38] sm:$0xff]
    %v1147 = vrcp.pop %v1139
    %v1148 = vrcp.pop %v1140
    %v1149 = vrcp.pop %v1141
    %v1150 = vrcp.pop %v1142
    %v1151 = vrcp.pop %v1143
    %v1152 = vrcp.pop %v1144
    %v1153 = vrcp.pop %v1145
    %v1154 = vrcp.pop %v1146
    %v1155 = vld [vmem:[#allocation4] sm:$0xff]
    %v1156 = vld [vmem:[#allocation4 + $0x8] sm:$0xff]
    %v1157 = vld [vmem:[#allocation4 + $0x10] sm:$0xff]
    %v1158 = vld [vmem:[#allocation4 + $0x18] sm:$0xff]
    %v1159 = vld [vmem:[#allocation4 + $0x20] sm:$0xff]
    %v1160 = vld [vmem:[#allocation4 + $0x28] sm:$0xff]
    %v1161 = vld [vmem:[#allocation4 + $0x30] sm:$0xff]
    %v1162 = vld [vmem:[#allocation4 + $0x38] sm:$0xff]
    %1164 = vset.pattern.permute.xlu0 0
    %1165 = vperm.xlu0 %1164, %v1147
    %v1166 = vpop.permute.xlu0 %1165
    %1169 = vset.pattern.permute.xlu0 0
    %1170 = vperm.xlu0 %1169, %v1148
    %v1171 = vpop.permute.xlu0 %1170
    %1174 = vset.pattern.permute.xlu0 0
    %1175 = vperm.xlu0 %1174, %v1149
    %v1176 = vpop.permute.xlu0 %1175
    %1179 = vset.pattern.permute.xlu0 0
    %1180 = vperm.xlu0 %1179, %v1150
    %v1181 = vpop.permute.xlu0 %1180
    %1184 = vset.pattern.permute.xlu0 0
    %1185 = vperm.xlu0 %1184, %v1151
    %v1186 = vpop.permute.xlu0 %1185
    %1189 = vset.pattern.permute.xlu0 0
    %1190 = vperm.xlu0 %1189, %v1152
    %v1191 = vpop.permute.xlu0 %1190
    %1194 = vset.pattern.permute.xlu0 0
    %1195 = vperm.xlu0 %1194, %v1153
    %v1196 = vpop.permute.xlu0 %1195
    %1199 = vset.pattern.permute.xlu0 0
    %1200 = vperm.xlu0 %1199, %v1154
    %v1201 = vpop.permute.xlu0 %1200
    %v1203 = vmul.f32 %v1155, %v1166
    %v1204 = vmul.f32 %v1156, %v1171
    %v1205 = vmul.f32 %v1157, %v1176
    %v1206 = vmul.f32 %v1158, %v1181
    %v1207 = vmul.f32 %v1159, %v1186
    %v1208 = vmul.f32 %v1160, %v1191
    %v1209 = vmul.f32 %v1161, %v1196
    %v1210 = vmul.f32 %v1162, %v1201
    %vm1211 = vcmask 64512
    %1212 = vst.msk [vmem:[%s3] sm:$0xff] %vm1211, %v1203
    %1213 = vst.msk [vmem:[%s3 + $0x8] sm:$0xff] %vm1211, %v1204
    %1214 = vst.msk [vmem:[%s3 + $0x10] sm:$0xff] %vm1211, %v1205
    %1215 = vst.msk [vmem:[%s3 + $0x18] sm:$0xff] %vm1211, %v1206
    %1216 = vst.msk [vmem:[%s3 + $0x20] sm:$0xff] %vm1211, %v1207
    %1217 = vst.msk [vmem:[%s3 + $0x28] sm:$0xff] %vm1211, %v1208
    %1218 = vst.msk [vmem:[%s3 + $0x30] sm:$0xff] %vm1211, %v1209
    %1219 = vst.msk [vmem:[%s3 + $0x38] sm:$0xff] %vm1211, %v1210
  $region25: #{transformer_forward.12} parent=0 // pred_fallthru
    _
  // Predicated region
  $region26: #{transformer_forward.12} parent=0 // pred_check
    _
  $region27: #{transformer_forward.12} parent=0 // pred_check_branch
    %1221 = sbr.rel (0) target = $region29
  $region28: #{transformer_forward.12} parent=0 // pred_region
    _
  $region29: #{transformer_forward.12} parent=0 // pred_fallthru
    _
  // Predicated region
  $region30: #{transformer_forward.12} parent=0 // pred_check
    _
  $region31: #{transformer_forward.12} parent=0 // pred_check_branch
    %1223 = sbr.rel (0) target = $region33
  $region32: #{transformer_forward.12} parent=0 // pred_region
    _
  $region33: #{transformer_forward.12} parent=0 // pred_fallthru
    _

</llo_original>
